<compile_context>
chip_gen: v7x
topology: tpu7x:2x2x1
jax: 0.10.0
libtpu: 0.0.40
codegen_flags: <defaults>
</compile_context>

<pallas_src>
import functools

import jax
import jax.numpy as jnp
from jax.experimental import pallas as pl
from jax.experimental.pallas import tpu as pltpu


# ---------------------------------------------------------------------------
# Host-side weight transforms (pure weight re-layout, fused under jit)
# ---------------------------------------------------------------------------
def _banded_conv_weight(w, w_in):
    """(Cout, Cin, kh, kw) conv weight -> width-banded matmul operand B of
    shape (kh*w_in*Cin, w_out*Cout) such that, for activations laid out as
    rows=(n, h), lanes=(w, cin),
        conv(x, w)[n, ho, wo, co] == (A @ B)[(n, ho), wo*Cout + co]
    with A[(n, ho), i*w_in*Cin + wi*Cin + ci] = x[n, ho+i, wi, ci]."""
    cout, cin, kh, kw = w.shape
    w_out = w_in - kw + 1
    i = jnp.arange(kh).reshape(kh, 1, 1, 1, 1)
    wi = jnp.arange(w_in).reshape(1, w_in, 1, 1, 1)
    ci = jnp.arange(cin).reshape(1, 1, cin, 1, 1)
    wo = jnp.arange(w_out).reshape(1, 1, 1, w_out, 1)
    co = jnp.arange(cout).reshape(1, 1, 1, 1, cout)
    j = wi - wo
    band = jnp.where((j >= 0) & (j < kw),
                     w[co, ci, i, jnp.clip(j, 0, kw - 1)], 0.0)
    return band.reshape(kh * w_in * cin, w_out * cout)


# ---------------------------------------------------------------------------
# The fused Pallas kernel
# ---------------------------------------------------------------------------
def _net_fwd_kernel(n_batch, x_ref, c1w_ref, c1b_ref, c2w_ref, c2b_ref,
                    f1w_ref, f1b_ref, f2w_ref, f2b_ref, out_ref):
    bf16 = jnp.bfloat16
    f32 = jnp.float32

    def lane_block(v, k, width):
        return v[:, k * width:(k + 1) * width]

    # ---- conv1: 1->32, 5x5, 28x28 -> 24x24 ---------------------------------
    # rows = (n, ho); a1 lanes = (i, w); c1 lanes = (wo, cout)
    a1 = jnp.concatenate(
        [jnp.concatenate(
            [x_ref[n * 28 + i:n * 28 + i + 24, :] for i in range(5)], axis=1)
         for n in range(n_batch)], axis=0)                       # (N*24, 140)
    c1 = jnp.dot(a1.astype(bf16), c1w_ref[...],
                 preferred_element_type=f32) + c1b_ref[...]      # (N*24, 768)

    # ---- max-pool 3x3 stride 3, then ReLU ----------------------------------
    # width pooling: max over 3 adjacent 32-lane (cout) blocks
    pw1 = jnp.concatenate(
        [jnp.maximum(jnp.maximum(lane_block(c1, 3 * p, 32),
                                 lane_block(c1, 3 * p + 1, 32)),
                     lane_block(c1, 3 * p + 2, 32)) for p in range(8)],
        axis=1)                                                  # (N*24, 256)
    # height pooling: max over 3 adjacent rows within each image
    p1 = jnp.concatenate(
        [jnp.max(pw1[n * 24 + 3 * h:n * 24 + 3 * h + 3, :],
                 axis=0, keepdims=True)
         for n in range(n_batch) for h in range(8)], axis=0)     # (N*8, 256)
    p1 = jnp.maximum(p1, 0.0)                                    # lanes=(wp, c)

    # ---- conv2: 32->64, 5x5, 8x8 -> 4x4 ------------------------------------
    a2 = jnp.concatenate(
        [jnp.concatenate(
            [p1[n * 8 + i:n * 8 + i + 4, :] for i in range(5)], axis=1)
         for n in range(n_batch)], axis=0)                       # (N*4, 1280)
    c2 = jnp.dot(a2.astype(bf16), c2w_ref[...],
                 preferred_element_type=f32) + c2b_ref[...]      # (N*4, 256)

    # ---- max-pool 2x2 stride 2, ReLU, flatten to (N, 256) ------------------
    pw2 = jnp.concatenate(
        [jnp.maximum(lane_block(c2, 0, 64), lane_block(c2, 1, 64)),
         jnp.maximum(lane_block(c2, 2, 64), lane_block(c2, 3, 64))],
        axis=1)                                                  # (N*4, 128)
    p2 = jnp.concatenate(
        [jnp.concatenate(
            [jnp.max(pw2[n * 4 + 2 * h:n * 4 + 2 * h + 2, :],
                     axis=0, keepdims=True) for h in range(2)], axis=1)
         for n in range(n_batch)], axis=0)                       # (N, 256), lanes=(hp, wp, c)
    p2 = jnp.maximum(p2, 0.0)

    # ---- fc1 (+ReLU) and fc2 -----------------------------------------------
    h1 = jnp.dot(p2.astype(bf16), f1w_ref[...],
                 preferred_element_type=f32) + f1b_ref[...]      # (N, 128)
    h1 = jnp.maximum(h1, 0.0)
    out_ref[...] = jnp.dot(h1.astype(bf16), f2w_ref[...],
                           preferred_element_type=f32) + f2b_ref[...]


# ---------------------------------------------------------------------------
# Wrapper: weight re-layout + single pallas_call
# ---------------------------------------------------------------------------
def net_forward(x, params):
    """Fused Pallas forward of Net. x: (N, 1, 28, 28) float32."""
    w1, b1, w2, b2, wf1, bf1, wf2, bf2 = params
    n = x.shape[0]
    assert x.shape[1:] == (1, 28, 28), x.shape
    nb_hidden = wf1.shape[0]
    hpad = ((nb_hidden + 127) // 128) * 128

    # Activations enter as rows=(n, h), lanes=w (Cin == 1).
    x2d = x.reshape(n * 28, 28).astype(jnp.float32)

    # Conv weights as width-banded MXU operands (bf16 feeds the MXU).
    c1w = _banded_conv_weight(w1, 28).astype(jnp.bfloat16)          # (140, 768)
    c2w = _banded_conv_weight(w2, 8).astype(jnp.bfloat16)           # (1280, 256)
    c1b = jnp.tile(b1, 24).reshape(1, 24 * 32).astype(jnp.float32)  # lanes=(wo, co)
    c2b = jnp.tile(b2, 4).reshape(1, 4 * 64).astype(jnp.float32)

    # fc1: permute input features from the kernel's (hp, wp, c) lane order to
    # PyTorch's flatten order (c, hp, wp); zero-pad hidden to lane-dense 128.
    g = jnp.arange(256)
    hp, wp, c = g // 128, (g % 128) // 64, g % 64
    feat = c * 4 + hp * 2 + wp
    f1w = jnp.pad(wf1.T[feat, :], ((0, 0), (0, hpad - nb_hidden)))
    f1b = jnp.pad(bf1, (0, hpad - nb_hidden)).reshape(1, hpad)
    f2w = jnp.pad(wf2.T, ((0, hpad - nb_hidden), (0, 0)))           # (hpad, 10)
    f2b = bf2.reshape(1, 10)

    vmem = pl.BlockSpec(memory_space=pltpu.MemorySpace.VMEM)
    kernel = functools.partial(_net_fwd_kernel, n)
    return pl.pallas_call(
        kernel,
        out_shape=jax.ShapeDtypeStruct((n, 10), jnp.float32),
        in_specs=[vmem] * 9,
        out_specs=vmem,
    )(x2d, c1w, c1b, c2w, c2b,
      f1w.astype(jnp.bfloat16), f1b.astype(jnp.float32),
      f2w.astype(jnp.bfloat16), f2b.astype(jnp.float32))


# ---------------------------------------------------------------------------
# Parameter init and pure-JAX reference (mirrors the PyTorch forward)
# ---------------------------------------------------------------------------
def init_params(key, nb_hidden=32):
    ks = jax.random.split(key, 8)
    scale = 0.1
    w1 = scale * jax.random.normal(ks[0], (32, 1, 5, 5), jnp.float32)
    b1 = scale * jax.random.normal(ks[1], (32,), jnp.float32)
    w2 = scale * jax.random.normal(ks[2], (64, 32, 5, 5), jnp.float32)
    b2 = scale * jax.random.normal(ks[3], (64,), jnp.float32)
    wf1 = scale * jax.random.normal(ks[4], (nb_hidden, 256), jnp.float32)
    bf1 = scale * jax.random.normal(ks[5], (nb_hidden,), jnp.float32)
    wf2 = scale * jax.random.normal(ks[6], (10, nb_hidden), jnp.float32)
    bf2 = scale * jax.random.normal(ks[7], (10,), jnp.float32)
    return (w1, b1, w2, b2, wf1, bf1, wf2, bf2)


def reference_forward(x, params):
    w1, b1, w2, b2, wf1, bf1, wf2, bf2 = params

    def conv(x, w, b):
        y = jax.lax.conv_general_dilated(
            x, w, (1, 1), "VALID", dimension_numbers=("NCHW", "OIHW", "NCHW"))
        return y + b[None, :, None, None]

    def pool(x, k, s):
        return jax.lax.reduce_window(
            x, -jnp.inf, jax.lax.max, (1, 1, k, k), (1, 1, s, s), "VALID")

    h = jax.nn.relu(pool(conv(x, w1, b1), 3, 3))
    h = jax.nn.relu(pool(conv(h, w2, b2), 2, 2))
    h = h.reshape(h.shape[0], -1)
    h = jax.nn.relu(h @ wf1.T + bf1)
    return h @ wf2.T + bf2


if __name__ == "__main__":
    key = jax.random.PRNGKey(0)
    kx, kp = jax.random.split(key)
    # fc1 expects 256 = 64*2*2 features -> spatial input must be 28x28 (MNIST)
    x = jax.random.normal(kx, (2, 1, 28, 28), jnp.float32)
    params = init_params(kp, nb_hidden=32)

    fwd = jax.jit(net_forward)
    out = jax.block_until_ready(fwd(x, params))
    assert out.shape == (2, 10), out.shape

    ref = jax.block_until_ready(reference_forward(x, params))
    # Tolerance covers bf16 MXU operands (f32 accumulation) across 4 layers.
    if not jnp.allclose(out, ref, atol=1e-1, rtol=1e-1):
        raise AssertionError(
            f"mismatch vs reference: max abs diff "
            f"{float(jnp.max(jnp.abs(out - ref)))}")
    print("KERNEL_OK")
</pallas_src>

<mosaic_0001>
module attributes {stable_mosaic.version = 11 : i64} {
  func.func @_net_fwd_kernel(%arg0: memref<56x28xf32, #tpu.memory_space<vmem>>, %arg1: memref<140x768xbf16, #tpu.memory_space<vmem>>, %arg2: memref<1x768xf32, #tpu.memory_space<vmem>>, %arg3: memref<1280x256xbf16, #tpu.memory_space<vmem>>, %arg4: memref<1x256xf32, #tpu.memory_space<vmem>>, %arg5: memref<256x128xbf16, #tpu.memory_space<vmem>>, %arg6: memref<1x128xf32, #tpu.memory_space<vmem>>, %arg7: memref<128x10xbf16, #tpu.memory_space<vmem>>, %arg8: memref<1x10xf32, #tpu.memory_space<vmem>>, %arg9: memref<2x10xf32, #tpu.memory_space<vmem>>) attributes {dimension_semantics = [], scalar_prefetch = 0 : i64, scratch_operands = 0 : i64, tpu.core_type = #tpu.core_type<tc>} {
    %c0 = arith.constant 0 : index
    %c0_0 = arith.constant 0 : index
    %0 = vector.load %arg0[%c0, %c0_0] : memref<56x28xf32, #tpu.memory_space<vmem>>, vector<24x28xf32>
    %c1 = arith.constant 1 : index
    %c0_1 = arith.constant 0 : index
    %1 = vector.load %arg0[%c1, %c0_1] : memref<56x28xf32, #tpu.memory_space<vmem>>, vector<24x28xf32>
    %c2 = arith.constant 2 : index
    %c0_2 = arith.constant 0 : index
    %2 = vector.load %arg0[%c2, %c0_2] : memref<56x28xf32, #tpu.memory_space<vmem>>, vector<24x28xf32>
    %c3 = arith.constant 3 : index
    %c0_3 = arith.constant 0 : index
    %3 = vector.load %arg0[%c3, %c0_3] : memref<56x28xf32, #tpu.memory_space<vmem>>, vector<24x28xf32>
    %c4 = arith.constant 4 : index
    %c0_4 = arith.constant 0 : index
    %4 = vector.load %arg0[%c4, %c0_4] : memref<56x28xf32, #tpu.memory_space<vmem>>, vector<24x28xf32>
    %5 = tpu.concatenate %0, %1, %2, %3, %4 in 1 : vector<24x28xf32>, vector<24x28xf32>, vector<24x28xf32>, vector<24x28xf32>, vector<24x28xf32> -> vector<24x140xf32>
    %c28 = arith.constant 28 : index
    %c0_5 = arith.constant 0 : index
    %6 = vector.load %arg0[%c28, %c0_5] : memref<56x28xf32, #tpu.memory_space<vmem>>, vector<24x28xf32>
    %c29 = arith.constant 29 : index
    %c0_6 = arith.constant 0 : index
    %7 = vector.load %arg0[%c29, %c0_6] : memref<56x28xf32, #tpu.memory_space<vmem>>, vector<24x28xf32>
    %c30 = arith.constant 30 : index
    %c0_7 = arith.constant 0 : index
    %8 = vector.load %arg0[%c30, %c0_7] : memref<56x28xf32, #tpu.memory_space<vmem>>, vector<24x28xf32>
    %c31 = arith.constant 31 : index
    %c0_8 = arith.constant 0 : index
    %9 = vector.load %arg0[%c31, %c0_8] : memref<56x28xf32, #tpu.memory_space<vmem>>, vector<24x28xf32>
    %c32 = arith.constant 32 : index
    %c0_9 = arith.constant 0 : index
    %10 = vector.load %arg0[%c32, %c0_9] : memref<56x28xf32, #tpu.memory_space<vmem>>, vector<24x28xf32>
    %11 = tpu.concatenate %6, %7, %8, %9, %10 in 1 : vector<24x28xf32>, vector<24x28xf32>, vector<24x28xf32>, vector<24x28xf32>, vector<24x28xf32> -> vector<24x140xf32>
    %12 = tpu.concatenate %5, %11 in 0 : vector<24x140xf32>, vector<24x140xf32> -> vector<48x140xf32>
    %13 = arith.truncf %12 : vector<48x140xf32> to vector<48x140xbf16>
    %c0_10 = arith.constant 0 : index
    %c0_11 = arith.constant 0 : index
    %14 = vector.load %arg1[%c0_10, %c0_11] : memref<140x768xbf16, #tpu.memory_space<vmem>>, vector<140x768xbf16>
    %cst = arith.constant dense<0.000000e+00> : vector<48x768xf32>
    %15 = tpu.matmul %13, %14, %cst {dimension_numbers = #tpu.dot_dimension_numbers<[1], [0], [0], [1], [0, 0, 1, 1], [], []>} : vector<48x140xbf16>, vector<140x768xbf16>, vector<48x768xf32> -> vector<48x768xf32>
    %c0_12 = arith.constant 0 : index
    %c0_13 = arith.constant 0 : index
    %16 = vector.load %arg2[%c0_12, %c0_13] : memref<1x768xf32, #tpu.memory_space<vmem>>, vector<1x768xf32>
    %17 = vector.broadcast %16 : vector<1x768xf32> to vector<48x768xf32>
    %18 = arith.addf %15, %17 : vector<48x768xf32>
    %19 = vector.extract_strided_slice %18 {offsets = [0, 0], sizes = [48, 32], strides = [1, 1]} : vector<48x768xf32> to vector<48x32xf32>
    %20 = vector.extract_strided_slice %18 {offsets = [0, 32], sizes = [48, 32], strides = [1, 1]} : vector<48x768xf32> to vector<48x32xf32>
    %21 = arith.maximumf %19, %20 : vector<48x32xf32>
    %22 = vector.extract_strided_slice %18 {offsets = [0, 64], sizes = [48, 32], strides = [1, 1]} : vector<48x768xf32> to vector<48x32xf32>
    %23 = arith.maximumf %21, %22 : vector<48x32xf32>
    %24 = vector.extract_strided_slice %18 {offsets = [0, 96], sizes = [48, 32], strides = [1, 1]} : vector<48x768xf32> to vector<48x32xf32>
    %25 = vector.extract_strided_slice %18 {offsets = [0, 128], sizes = [48, 32], strides = [1, 1]} : vector<48x768xf32> to vector<48x32xf32>
    %26 = arith.maximumf %24, %25 : vector<48x32xf32>
    %27 = vector.extract_strided_slice %18 {offsets = [0, 160], sizes = [48, 32], strides = [1, 1]} : vector<48x768xf32> to vector<48x32xf32>
    %28 = arith.maximumf %26, %27 : vector<48x32xf32>
    %29 = vector.extract_strided_slice %18 {offsets = [0, 192], sizes = [48, 32], strides = [1, 1]} : vector<48x768xf32> to vector<48x32xf32>
    %30 = vector.extract_strided_slice %18 {offsets = [0, 224], sizes = [48, 32], strides = [1, 1]} : vector<48x768xf32> to vector<48x32xf32>
    %31 = arith.maximumf %29, %30 : vector<48x32xf32>
    %32 = vector.extract_strided_slice %18 {offsets = [0, 256], sizes = [48, 32], strides = [1, 1]} : vector<48x768xf32> to vector<48x32xf32>
    %33 = arith.maximumf %31, %32 : vector<48x32xf32>
    %34 = vector.extract_strided_slice %18 {offsets = [0, 288], sizes = [48, 32], strides = [1, 1]} : vector<48x768xf32> to vector<48x32xf32>
    %35 = vector.extract_strided_slice %18 {offsets = [0, 320], sizes = [48, 32], strides = [1, 1]} : vector<48x768xf32> to vector<48x32xf32>
    %36 = arith.maximumf %34, %35 : vector<48x32xf32>
    %37 = vector.extract_strided_slice %18 {offsets = [0, 352], sizes = [48, 32], strides = [1, 1]} : vector<48x768xf32> to vector<48x32xf32>
    %38 = arith.maximumf %36, %37 : vector<48x32xf32>
    %39 = vector.extract_strided_slice %18 {offsets = [0, 384], sizes = [48, 32], strides = [1, 1]} : vector<48x768xf32> to vector<48x32xf32>
    %40 = vector.extract_strided_slice %18 {offsets = [0, 416], sizes = [48, 32], strides = [1, 1]} : vector<48x768xf32> to vector<48x32xf32>
    %41 = arith.maximumf %39, %40 : vector<48x32xf32>
    %42 = vector.extract_strided_slice %18 {offsets = [0, 448], sizes = [48, 32], strides = [1, 1]} : vector<48x768xf32> to vector<48x32xf32>
    %43 = arith.maximumf %41, %42 : vector<48x32xf32>
    %44 = vector.extract_strided_slice %18 {offsets = [0, 480], sizes = [48, 32], strides = [1, 1]} : vector<48x768xf32> to vector<48x32xf32>
    %45 = vector.extract_strided_slice %18 {offsets = [0, 512], sizes = [48, 32], strides = [1, 1]} : vector<48x768xf32> to vector<48x32xf32>
    %46 = arith.maximumf %44, %45 : vector<48x32xf32>
    %47 = vector.extract_strided_slice %18 {offsets = [0, 544], sizes = [48, 32], strides = [1, 1]} : vector<48x768xf32> to vector<48x32xf32>
    %48 = arith.maximumf %46, %47 : vector<48x32xf32>
    %49 = vector.extract_strided_slice %18 {offsets = [0, 576], sizes = [48, 32], strides = [1, 1]} : vector<48x768xf32> to vector<48x32xf32>
    %50 = vector.extract_strided_slice %18 {offsets = [0, 608], sizes = [48, 32], strides = [1, 1]} : vector<48x768xf32> to vector<48x32xf32>
    %51 = arith.maximumf %49, %50 : vector<48x32xf32>
    %52 = vector.extract_strided_slice %18 {offsets = [0, 640], sizes = [48, 32], strides = [1, 1]} : vector<48x768xf32> to vector<48x32xf32>
    %53 = arith.maximumf %51, %52 : vector<48x32xf32>
    %54 = vector.extract_strided_slice %18 {offsets = [0, 672], sizes = [48, 32], strides = [1, 1]} : vector<48x768xf32> to vector<48x32xf32>
    %55 = vector.extract_strided_slice %18 {offsets = [0, 704], sizes = [48, 32], strides = [1, 1]} : vector<48x768xf32> to vector<48x32xf32>
    %56 = arith.maximumf %54, %55 : vector<48x32xf32>
    %57 = vector.extract_strided_slice %18 {offsets = [0, 736], sizes = [48, 32], strides = [1, 1]} : vector<48x768xf32> to vector<48x32xf32>
    %58 = arith.maximumf %56, %57 : vector<48x32xf32>
    %59 = tpu.concatenate %23, %28, %33, %38, %43, %48, %53, %58 in 1 : vector<48x32xf32>, vector<48x32xf32>, vector<48x32xf32>, vector<48x32xf32>, vector<48x32xf32>, vector<48x32xf32>, vector<48x32xf32>, vector<48x32xf32> -> vector<48x256xf32>
    %60 = vector.extract_strided_slice %59 {offsets = [0, 0], sizes = [3, 256], strides = [1, 1]} : vector<48x256xf32> to vector<3x256xf32>
    %cst_14 = arith.constant dense<0xFF800000> : vector<256xf32>
    %61 = vector.multi_reduction <maximumf>, %60, %cst_14 [0] : vector<3x256xf32> to vector<256xf32>
    %62 = vector.shape_cast %61 : vector<256xf32> to vector<1x256xf32>
    %63 = vector.extract_strided_slice %59 {offsets = [3, 0], sizes = [3, 256], strides = [1, 1]} : vector<48x256xf32> to vector<3x256xf32>
    %cst_15 = arith.constant dense<0xFF800000> : vector<256xf32>
    %64 = vector.multi_reduction <maximumf>, %63, %cst_15 [0] : vector<3x256xf32> to vector<256xf32>
    %65 = vector.shape_cast %64 : vector<256xf32> to vector<1x256xf32>
    %66 = vector.extract_strided_slice %59 {offsets = [6, 0], sizes = [3, 256], strides = [1, 1]} : vector<48x256xf32> to vector<3x256xf32>
    %cst_16 = arith.constant dense<0xFF800000> : vector<256xf32>
    %67 = vector.multi_reduction <maximumf>, %66, %cst_16 [0] : vector<3x256xf32> to vector<256xf32>
    %68 = vector.shape_cast %67 : vector<256xf32> to vector<1x256xf32>
    %69 = vector.extract_strided_slice %59 {offsets = [9, 0], sizes = [3, 256], strides = [1, 1]} : vector<48x256xf32> to vector<3x256xf32>
    %cst_17 = arith.constant dense<0xFF800000> : vector<256xf32>
    %70 = vector.multi_reduction <maximumf>, %69, %cst_17 [0] : vector<3x256xf32> to vector<256xf32>
    %71 = vector.shape_cast %70 : vector<256xf32> to vector<1x256xf32>
    %72 = vector.extract_strided_slice %59 {offsets = [12, 0], sizes = [3, 256], strides = [1, 1]} : vector<48x256xf32> to vector<3x256xf32>
    %cst_18 = arith.constant dense<0xFF800000> : vector<256xf32>
    %73 = vector.multi_reduction <maximumf>, %72, %cst_18 [0] : vector<3x256xf32> to vector<256xf32>
    %74 = vector.shape_cast %73 : vector<256xf32> to vector<1x256xf32>
    %75 = vector.extract_strided_slice %59 {offsets = [15, 0], sizes = [3, 256], strides = [1, 1]} : vector<48x256xf32> to vector<3x256xf32>
    %cst_19 = arith.constant dense<0xFF800000> : vector<256xf32>
    %76 = vector.multi_reduction <maximumf>, %75, %cst_19 [0] : vector<3x256xf32> to vector<256xf32>
    %77 = vector.shape_cast %76 : vector<256xf32> to vector<1x256xf32>
    %78 = vector.extract_strided_slice %59 {offsets = [18, 0], sizes = [3, 256], strides = [1, 1]} : vector<48x256xf32> to vector<3x256xf32>
    %cst_20 = arith.constant dense<0xFF800000> : vector<256xf32>
    %79 = vector.multi_reduction <maximumf>, %78, %cst_20 [0] : vector<3x256xf32> to vector<256xf32>
    %80 = vector.shape_cast %79 : vector<256xf32> to vector<1x256xf32>
    %81 = vector.extract_strided_slice %59 {offsets = [21, 0], sizes = [3, 256], strides = [1, 1]} : vector<48x256xf32> to vector<3x256xf32>
    %cst_21 = arith.constant dense<0xFF800000> : vector<256xf32>
    %82 = vector.multi_reduction <maximumf>, %81, %cst_21 [0] : vector<3x256xf32> to vector<256xf32>
    %83 = vector.shape_cast %82 : vector<256xf32> to vector<1x256xf32>
    %84 = vector.extract_strided_slice %59 {offsets = [24, 0], sizes = [3, 256], strides = [1, 1]} : vector<48x256xf32> to vector<3x256xf32>
    %cst_22 = arith.constant dense<0xFF800000> : vector<256xf32>
    %85 = vector.multi_reduction <maximumf>, %84, %cst_22 [0] : vector<3x256xf32> to vector<256xf32>
    %86 = vector.shape_cast %85 : vector<256xf32> to vector<1x256xf32>
    %87 = vector.extract_strided_slice %59 {offsets = [27, 0], sizes = [3, 256], strides = [1, 1]} : vector<48x256xf32> to vector<3x256xf32>
    %cst_23 = arith.constant dense<0xFF800000> : vector<256xf32>
    %88 = vector.multi_reduction <maximumf>, %87, %cst_23 [0] : vector<3x256xf32> to vector<256xf32>
    %89 = vector.shape_cast %88 : vector<256xf32> to vector<1x256xf32>
    %90 = vector.extract_strided_slice %59 {offsets = [30, 0], sizes = [3, 256], strides = [1, 1]} : vector<48x256xf32> to vector<3x256xf32>
    %cst_24 = arith.constant dense<0xFF800000> : vector<256xf32>
    %91 = vector.multi_reduction <maximumf>, %90, %cst_24 [0] : vector<3x256xf32> to vector<256xf32>
    %92 = vector.shape_cast %91 : vector<256xf32> to vector<1x256xf32>
    %93 = vector.extract_strided_slice %59 {offsets = [33, 0], sizes = [3, 256], strides = [1, 1]} : vector<48x256xf32> to vector<3x256xf32>
    %cst_25 = arith.constant dense<0xFF800000> : vector<256xf32>
    %94 = vector.multi_reduction <maximumf>, %93, %cst_25 [0] : vector<3x256xf32> to vector<256xf32>
    %95 = vector.shape_cast %94 : vector<256xf32> to vector<1x256xf32>
    %96 = vector.extract_strided_slice %59 {offsets = [36, 0], sizes = [3, 256], strides = [1, 1]} : vector<48x256xf32> to vector<3x256xf32>
    %cst_26 = arith.constant dense<0xFF800000> : vector<256xf32>
    %97 = vector.multi_reduction <maximumf>, %96, %cst_26 [0] : vector<3x256xf32> to vector<256xf32>
    %98 = vector.shape_cast %97 : vector<256xf32> to vector<1x256xf32>
    %99 = vector.extract_strided_slice %59 {offsets = [39, 0], sizes = [3, 256], strides = [1, 1]} : vector<48x256xf32> to vector<3x256xf32>
    %cst_27 = arith.constant dense<0xFF800000> : vector<256xf32>
    %100 = vector.multi_reduction <maximumf>, %99, %cst_27 [0] : vector<3x256xf32> to vector<256xf32>
    %101 = vector.shape_cast %100 : vector<256xf32> to vector<1x256xf32>
    %102 = vector.extract_strided_slice %59 {offsets = [42, 0], sizes = [3, 256], strides = [1, 1]} : vector<48x256xf32> to vector<3x256xf32>
    %cst_28 = arith.constant dense<0xFF800000> : vector<256xf32>
    %103 = vector.multi_reduction <maximumf>, %102, %cst_28 [0] : vector<3x256xf32> to vector<256xf32>
    %104 = vector.shape_cast %103 : vector<256xf32> to vector<1x256xf32>
    %105 = vector.extract_strided_slice %59 {offsets = [45, 0], sizes = [3, 256], strides = [1, 1]} : vector<48x256xf32> to vector<3x256xf32>
    %cst_29 = arith.constant dense<0xFF800000> : vector<256xf32>
    %106 = vector.multi_reduction <maximumf>, %105, %cst_29 [0] : vector<3x256xf32> to vector<256xf32>
    %107 = vector.shape_cast %106 : vector<256xf32> to vector<1x256xf32>
    %108 = tpu.concatenate %62, %65, %68, %71, %74, %77, %80, %83, %86, %89, %92, %95, %98, %101, %104, %107 in 0 : vector<1x256xf32>, vector<1x256xf32>, vector<1x256xf32>, vector<1x256xf32>, vector<1x256xf32>, vector<1x256xf32>, vector<1x256xf32>, vector<1x256xf32>, vector<1x256xf32>, vector<1x256xf32>, vector<1x256xf32>, vector<1x256xf32>, vector<1x256xf32>, vector<1x256xf32>, vector<1x256xf32>, vector<1x256xf32> -> vector<16x256xf32>
    %cst_30 = arith.constant 0.000000e+00 : f32
    %109 = vector.broadcast %cst_30 : f32 to vector<16x256xf32>
    %110 = arith.maximumf %108, %109 : vector<16x256xf32>
    %111 = vector.extract_strided_slice %110 {offsets = [0, 0], sizes = [4, 256], strides = [1, 1]} : vector<16x256xf32> to vector<4x256xf32>
    %112 = vector.extract_strided_slice %110 {offsets = [1, 0], sizes = [4, 256], strides = [1, 1]} : vector<16x256xf32> to vector<4x256xf32>
    %113 = vector.extract_strided_slice %110 {offsets = [2, 0], sizes = [4, 256], strides = [1, 1]} : vector<16x256xf32> to vector<4x256xf32>
    %114 = vector.extract_strided_slice %110 {offsets = [3, 0], sizes = [4, 256], strides = [1, 1]} : vector<16x256xf32> to vector<4x256xf32>
    %115 = vector.extract_strided_slice %110 {offsets = [4, 0], sizes = [4, 256], strides = [1, 1]} : vector<16x256xf32> to vector<4x256xf32>
    %116 = tpu.concatenate %111, %112, %113, %114, %115 in 1 : vector<4x256xf32>, vector<4x256xf32>, vector<4x256xf32>, vector<4x256xf32>, vector<4x256xf32> -> vector<4x1280xf32>
    %117 = vector.extract_strided_slice %110 {offsets = [8, 0], sizes = [4, 256], strides = [1, 1]} : vector<16x256xf32> to vector<4x256xf32>
    %118 = vector.extract_strided_slice %110 {offsets = [9, 0], sizes = [4, 256], strides = [1, 1]} : vector<16x256xf32> to vector<4x256xf32>
    %119 = vector.extract_strided_slice %110 {offsets = [10, 0], sizes = [4, 256], strides = [1, 1]} : vector<16x256xf32> to vector<4x256xf32>
    %120 = vector.extract_strided_slice %110 {offsets = [11, 0], sizes = [4, 256], strides = [1, 1]} : vector<16x256xf32> to vector<4x256xf32>
    %121 = vector.extract_strided_slice %110 {offsets = [12, 0], sizes = [4, 256], strides = [1, 1]} : vector<16x256xf32> to vector<4x256xf32>
    %122 = tpu.concatenate %117, %118, %119, %120, %121 in 1 : vector<4x256xf32>, vector<4x256xf32>, vector<4x256xf32>, vector<4x256xf32>, vector<4x256xf32> -> vector<4x1280xf32>
    %123 = tpu.concatenate %116, %122 in 0 : vector<4x1280xf32>, vector<4x1280xf32> -> vector<8x1280xf32>
    %124 = arith.truncf %123 : vector<8x1280xf32> to vector<8x1280xbf16>
    %c0_31 = arith.constant 0 : index
    %c0_32 = arith.constant 0 : index
    %125 = vector.load %arg3[%c0_31, %c0_32] : memref<1280x256xbf16, #tpu.memory_space<vmem>>, vector<1280x256xbf16>
    %cst_33 = arith.constant dense<0.000000e+00> : vector<8x256xf32>
    %126 = tpu.matmul %124, %125, %cst_33 {dimension_numbers = #tpu.dot_dimension_numbers<[1], [0], [0], [1], [0, 0, 1, 1], [], []>} : vector<8x1280xbf16>, vector<1280x256xbf16>, vector<8x256xf32> -> vector<8x256xf32>
    %c0_34 = arith.constant 0 : index
    %c0_35 = arith.constant 0 : index
    %127 = vector.load %arg4[%c0_34, %c0_35] : memref<1x256xf32, #tpu.memory_space<vmem>>, vector<1x256xf32>
    %128 = vector.broadcast %127 : vector<1x256xf32> to vector<8x256xf32>
    %129 = arith.addf %126, %128 : vector<8x256xf32>
    %130 = vector.extract_strided_slice %129 {offsets = [0, 0], sizes = [8, 64], strides = [1, 1]} : vector<8x256xf32> to vector<8x64xf32>
    %131 = vector.extract_strided_slice %129 {offsets = [0, 64], sizes = [8, 64], strides = [1, 1]} : vector<8x256xf32> to vector<8x64xf32>
    %132 = arith.maximumf %130, %131 : vector<8x64xf32>
    %133 = vector.extract_strided_slice %129 {offsets = [0, 128], sizes = [8, 64], strides = [1, 1]} : vector<8x256xf32> to vector<8x64xf32>
    %134 = vector.extract_strided_slice %129 {offsets = [0, 192], sizes = [8, 64], strides = [1, 1]} : vector<8x256xf32> to vector<8x64xf32>
    %135 = arith.maximumf %133, %134 : vector<8x64xf32>
    %136 = tpu.concatenate %132, %135 in 1 : vector<8x64xf32>, vector<8x64xf32> -> vector<8x128xf32>
    %137 = vector.extract_strided_slice %136 {offsets = [0, 0], sizes = [2, 128], strides = [1, 1]} : vector<8x128xf32> to vector<2x128xf32>
    %cst_36 = arith.constant dense<0xFF800000> : vector<128xf32>
    %138 = vector.multi_reduction <maximumf>, %137, %cst_36 [0] : vector<2x128xf32> to vector<128xf32>
    %139 = vector.shape_cast %138 : vector<128xf32> to vector<1x128xf32>
    %140 = vector.extract_strided_slice %136 {offsets = [2, 0], sizes = [2, 128], strides = [1, 1]} : vector<8x128xf32> to vector<2x128xf32>
    %cst_37 = arith.constant dense<0xFF800000> : vector<128xf32>
    %141 = vector.multi_reduction <maximumf>, %140, %cst_37 [0] : vector<2x128xf32> to vector<128xf32>
    %142 = vector.shape_cast %141 : vector<128xf32> to vector<1x128xf32>
    %143 = tpu.concatenate %139, %142 in 1 : vector<1x128xf32>, vector<1x128xf32> -> vector<1x256xf32>
    %144 = vector.extract_strided_slice %136 {offsets = [4, 0], sizes = [2, 128], strides = [1, 1]} : vector<8x128xf32> to vector<2x128xf32>
    %cst_38 = arith.constant dense<0xFF800000> : vector<128xf32>
    %145 = vector.multi_reduction <maximumf>, %144, %cst_38 [0] : vector<2x128xf32> to vector<128xf32>
    %146 = vector.shape_cast %145 : vector<128xf32> to vector<1x128xf32>
    %147 = vector.extract_strided_slice %136 {offsets = [6, 0], sizes = [2, 128], strides = [1, 1]} : vector<8x128xf32> to vector<2x128xf32>
    %cst_39 = arith.constant dense<0xFF800000> : vector<128xf32>
    %148 = vector.multi_reduction <maximumf>, %147, %cst_39 [0] : vector<2x128xf32> to vector<128xf32>
    %149 = vector.shape_cast %148 : vector<128xf32> to vector<1x128xf32>
    %150 = tpu.concatenate %146, %149 in 1 : vector<1x128xf32>, vector<1x128xf32> -> vector<1x256xf32>
    %151 = tpu.concatenate %143, %150 in 0 : vector<1x256xf32>, vector<1x256xf32> -> vector<2x256xf32>
    %cst_40 = arith.constant 0.000000e+00 : f32
    %152 = vector.broadcast %cst_40 : f32 to vector<2x256xf32>
    %153 = arith.maximumf %151, %152 : vector<2x256xf32>
    %154 = arith.truncf %153 : vector<2x256xf32> to vector<2x256xbf16>
    %c0_41 = arith.constant 0 : index
    %c0_42 = arith.constant 0 : index
    %155 = vector.load %arg5[%c0_41, %c0_42] : memref<256x128xbf16, #tpu.memory_space<vmem>>, vector<256x128xbf16>
    %cst_43 = arith.constant dense<0.000000e+00> : vector<2x128xf32>
    %156 = tpu.matmul %154, %155, %cst_43 {dimension_numbers = #tpu.dot_dimension_numbers<[1], [0], [0], [1], [0, 0, 1, 1], [], []>} : vector<2x256xbf16>, vector<256x128xbf16>, vector<2x128xf32> -> vector<2x128xf32>
    %c0_44 = arith.constant 0 : index
    %c0_45 = arith.constant 0 : index
    %157 = vector.load %arg6[%c0_44, %c0_45] : memref<1x128xf32, #tpu.memory_space<vmem>>, vector<1x128xf32>
    %158 = vector.broadcast %157 : vector<1x128xf32> to vector<2x128xf32>
    %159 = arith.addf %156, %158 : vector<2x128xf32>
    %cst_46 = arith.constant 0.000000e+00 : f32
    %160 = vector.broadcast %cst_46 : f32 to vector<2x128xf32>
    %161 = arith.maximumf %159, %160 : vector<2x128xf32>
    %162 = arith.truncf %161 : vector<2x128xf32> to vector<2x128xbf16>
    %c0_47 = arith.constant 0 : index
    %c0_48 = arith.constant 0 : index
    %163 = vector.load %arg7[%c0_47, %c0_48] : memref<128x10xbf16, #tpu.memory_space<vmem>>, vector<128x10xbf16>
    %cst_49 = arith.constant dense<0.000000e+00> : vector<2x10xf32>
    %164 = tpu.matmul %162, %163, %cst_49 {dimension_numbers = #tpu.dot_dimension_numbers<[1], [0], [0], [1], [0, 0, 1, 1], [], []>} : vector<2x128xbf16>, vector<128x10xbf16>, vector<2x10xf32> -> vector<2x10xf32>
    %c0_50 = arith.constant 0 : index
    %c0_51 = arith.constant 0 : index
    %165 = vector.load %arg8[%c0_50, %c0_51] : memref<1x10xf32, #tpu.memory_space<vmem>>, vector<1x10xf32>
    %166 = vector.broadcast %165 : vector<1x10xf32> to vector<2x10xf32>
    %167 = arith.addf %164, %166 : vector<2x10xf32>
    %c0_52 = arith.constant 0 : index
    %c0_53 = arith.constant 0 : index
    %168 = vector.load %arg9[%c0_52, %c0_53] : memref<2x10xf32, #tpu.memory_space<vmem>>, vector<2x10xf32>
    tpu.vector_store %arg9[%c0_52, %c0_53], %167 {strides = array<i32>} : memref<2x10xf32, #tpu.memory_space<vmem>>, vector<2x10xf32>,
    return
  }
}

</mosaic_0001>

<llo_original>
// kernel: tile.13
$region0: #{tile.13}
  #allocation0 [shape = 's32[1]{0}', space=sflag, size = 0x4, scoped, tag = 'scoped memory for tile.13']
  %s0 = inlined_call_operand.vmem [shape: f32[32], index: 0, kind: input, shape index: {}]
  %s1 = inlined_call_operand.vmem [shape: f32[24,32], index: 1, kind: output, shape index: {}]
  // Predicated region
  $region2: #{tile.13} parent=0 // pred_check
    _
  $region3: #{tile.13} parent=0 // pred_check_branch
    %3 = sbr.rel (0) target = $region5
  $region4: #{tile.13} parent=0 // pred_region
    _
  $region5: #{tile.13} parent=0 // pred_fallthru
    _
  %v4 = vld [vmem:[%s0] ss:$0 sm:$0xff]
  %5 = vst [vmem:[%s1] sm:$0xff] %v4
  %s6 = scalar_lea.vmem %s1, 8
  %7 = vst [vmem:[%s6] sm:$0xff] %v4
  %s8 = scalar_lea.vmem %s1, 16
  %9 = vst [vmem:[%s8] sm:$0xff] %v4

// kernel: tile.14
$region0: #{tile.14}
  %s0 = inlined_call_operand.vmem [shape: f32[24,32], index: 0, kind: input, shape index: {}]
  %s1 = inlined_call_operand.vmem [shape: f32[1,768], index: 1, kind: output, shape index: {}]
  $region1: #{tile.14} parent=0
    #allocation0 [shape = 'u8[24576]{0}', space=vmem, size = 0x6000, scoped, tag = 'scoped mem for output reshape']
    %v2 = vld [vmem:[%s0] ss:$4 sm:$0x3f]
    %vm3 = vcmask 261120
    %4 = vst.msk [vmem:[#allocation0] ss:$8 sm:$0xf] %vm3, %v2
    %5 = vst.msk [vmem:[#allocation0] ss:$8 sm:$0x30] %vm3, %v2
    %s6 = scalar_lea.vmem %s0, 3
    %v7 = vld [vmem:[%s6] ss:$4 sm:$0x3f]
    %8 = vrot.lane.b32.xlu0 %v7, 96
    %v9 = vpop.permute.xlu0 %8
    %vm10 = vcmask 1048320
    %11 = vst.msk [vmem:[#allocation0] ss:$8 sm:$0xf] %vm10, %v9
    %12 = vst.msk [vmem:[#allocation0] ss:$8 sm:$0x30] %vm10, %v9
    %s13 = scalar_lea.vmem %s0, 2
    %v14 = vld [vmem:[%s13] ss:$4 sm:$0x3f]
    %15 = vrot.lane.b32.xlu0 %v14, 64
    %v16 = vpop.permute.xlu0 %15
    %vm17 = vcmask 785920
    %18 = vst.msk [vmem:[#allocation0] ss:$8 sm:$0xf] %vm17, %v16
    %19 = vst.msk [vmem:[#allocation0] ss:$8 sm:$0x30] %vm17, %v16
    %s20 = scalar_lea.vmem %s0, 1
    %v21 = vld [vmem:[%s20] ss:$4 sm:$0x3f]
    %22 = vrot.lane.b32.xlu0 %v21, 32
    %v23 = vpop.permute.xlu0 %22
    %vm24 = vcmask 523520
    %25 = vst.msk [vmem:[#allocation0] ss:$8 sm:$0xf] %vm24, %v23
    %26 = vst.msk [vmem:[#allocation0] ss:$8 sm:$0x30] %vm24, %v23
    %s28 = sshllo.u32 0, 1
    %v30 = vld [vmem:[#allocation0] sm:%s28]
    %s31 = sshllo.u32 0, 1
    %32 = vst [vmem:[%s1] sm:%s31] %v30
    %s33 = scalar_lea.vmem [#allocation0], 8
    %v34 = vld [vmem:[%s33] sm:%s28]
    %s35 = sshllo.u32 0, 1
    %s36 = scalar_lea.vmem %s1, 1
    %37 = vst [vmem:[%s36] sm:%s35] %v34
    %s38 = scalar_lea.vmem [#allocation0], 16
    %v39 = vld [vmem:[%s38] sm:%s28]
    %s40 = sshllo.u32 0, 1
    %s41 = smul.addr 1, 2
    %s42 = scalar_lea.vmem %s1, %s41
    %43 = vst [vmem:[%s42] sm:%s40] %v39
    %s44 = scalar_lea.vmem [#allocation0], 24
    %v45 = vld [vmem:[%s44] sm:%s28]
    %s46 = sshllo.u32 0, 1
    %s47 = smul.addr 1, 3
    %s48 = scalar_lea.vmem %s1, %s47
    %49 = vst [vmem:[%s48] sm:%s46] %v45
    %s50 = scalar_lea.vmem [#allocation0], 32
    %v51 = vld [vmem:[%s50] sm:%s28]
    %s52 = sshllo.u32 0, 1
    %s53 = smul.addr 1, 4
    %s54 = scalar_lea.vmem %s1, %s53
    %55 = vst [vmem:[%s54] sm:%s52] %v51
    %s56 = scalar_lea.vmem [#allocation0], 40
    %v57 = vld [vmem:[%s56] sm:%s28]
    %s58 = sshllo.u32 0, 1
    %s59 = smul.addr 1, 5
    %s60 = scalar_lea.vmem %s1, %s59
    %61 = vst [vmem:[%s60] sm:%s58] %v57

// kernel: tile.18
$region0: #{tile.18}
  #allocation0 [shape = 's32[1]{0}', space=sflag, size = 0x4, scoped, tag = 'scoped memory for tile.18']
  %s0 = inlined_call_operand.vmem [shape: f32[64], index: 0, kind: input, shape index: {}]
  %s1 = inlined_call_operand.vmem [shape: f32[4,64], index: 1, kind: output, shape index: {}]
  // Predicated region
  $region2: #{tile.18} parent=0 // pred_check
    _
  $region3: #{tile.18} parent=0 // pred_check_branch
    %3 = sbr.rel (0) target = $region5
  $region4: #{tile.18} parent=0 // pred_region
    _
  $region5: #{tile.18} parent=0 // pred_fallthru
    _
  %v4 = vld [vmem:[%s0] ss:$0 sm:$0xff]
  %5 = vst [vmem:[%s1] sm:$0xf] %v4

// kernel: tile.19
$region0: #{tile.19}
  %s0 = inlined_call_operand.vmem [shape: f32[4,64], index: 0, kind: input, shape index: {}]
  %s1 = inlined_call_operand.vmem [shape: f32[1,256], index: 1, kind: output, shape index: {}]
  $region1: #{tile.19} parent=0
    #allocation0 [shape = 'u8[8192]{0}', space=vmem, size = 0x2000, scoped, tag = 'scoped mem for output reshape']
    #allocation1 [shape = 'u8[4096]{0}', space=vmem, size = 0x1000, scoped, tag = 'scoped mem for input reshape']
    %s3 = sshllo.u32 0, 4
    %v4 = vld [vmem:[%s0] sm:%s3]
    %5 = vst [vmem:[#allocation1] sm:%s3] %v4
    %s6 = smov 3
    %v7 = vld [vmem:[#allocation1] ss:$2 sm:%s6]
    %vm8 = vcmask 523264
    %9 = vst.msk [vmem:[#allocation0] ss:$8 sm:$0x3] %vm8, %v7
    %s10 = scalar_lea.vmem [#allocation1], 1
    %s11 = smov 3
    %v12 = vld [vmem:[%s10] ss:$2 sm:%s11]
    %13 = vrot.lane.b32.xlu0 %v12, 64
    %v14 = vpop.permute.xlu0 %13
    %vm15 = vcmask 1048064
    %16 = vst.msk [vmem:[#allocation0] ss:$8 sm:$0x3] %vm15, %v14
    %s18 = sshllo.u32 0, 1
    %v20 = vld [vmem:[#allocation0] sm:%s18]
    %s21 = sshllo.u32 0, 1
    %22 = vst [vmem:[%s1] sm:%s21] %v20
    %s23 = scalar_lea.vmem [#allocation0], 8
    %v24 = vld [vmem:[%s23] sm:%s18]
    %s25 = sshllo.u32 0, 1
    %s26 = scalar_lea.vmem %s1, 1
    %27 = vst [vmem:[%s26] sm:%s25] %v24

// kernel: net_forward.1
$region0: #{net_forward.1}
  #allocation0 [shape = 'u32[]', space=smem, size = 0x4, offset = 0x4, fixed_abs, tag = 'smem constant byte address 0x4 - core index']
  #allocation1 [shape = 'u32[144,128]{1,0:T(1,128)}', space=vmem, size = 0x12000, scoped, tag = 'internal scratch']
  %s0 = inlined_call_operand.vmem [shape: f32[56,28], index: 0, kind: input, shape index: {}]
  %s1 = inlined_call_operand.vmem [shape: bf16[140,768], index: 1, kind: input, shape index: {}]
  %s2 = inlined_call_operand.vmem [shape: f32[1,768], index: 2, kind: input, shape index: {}]
  %s3 = inlined_call_operand.vmem [shape: bf16[1280,256], index: 3, kind: input, shape index: {}]
  %s4 = inlined_call_operand.vmem [shape: f32[1,256], index: 4, kind: input, shape index: {}]
  %s5 = inlined_call_operand.vmem [shape: bf16[256,128], index: 5, kind: input, shape index: {}]
  %s6 = inlined_call_operand.vmem [shape: f32[1,128], index: 6, kind: input, shape index: {}]
  %s7 = inlined_call_operand.vmem [shape: bf16[128,10], index: 7, kind: input, shape index: {}]
  %s8 = inlined_call_operand.vmem [shape: f32[1,10], index: 8, kind: input, shape index: {}]
  %s9 = inlined_call_operand.hbm [shape: f32[2,10], index: 9, kind: output, shape index: {}]
  %s10 = sld [smem:[#allocation0]]
  $region46: #{net_forward.1} parent=0
    _
  %s12 = ssub.s32 1, %s10
  %s13 = scalar_select 0, %s12, %s10
  $region1: #{net_forward.1} parent=0
    #allocation2 [shape = 'u8[1024]{0}', space=vmem, size = 0x400, scoped, tag = 'output window, operand 0, single buffered']
    #allocation3 [shape = 's32[1]{0}', space=sflag, size = 0x4, scoped, tag = 'scoped memory for net_forward.1']
    %14 = vsyncpa [#allocation3], 0
    // Predicated region
    $region2: #{net_forward.1} parent=1 // pred_check
      _
    $region3: #{net_forward.1} parent=1 // pred_check_branch
      %16 = sbr.rel (0) target = $region5
    $region4: #{net_forward.1} parent=1 // pred_region
      _
    $region5: #{net_forward.1} parent=1 // pred_fallthru
      _
    // Predicated region
    $region6: #{net_forward.1} parent=1 // pred_check
      _
    $region7: #{net_forward.1} parent=1 // pred_check_branch
      %18 = sbr.rel (0) target = $region9
    $region8: #{net_forward.1} parent=1 // pred_region
      _
    $region9: #{net_forward.1} parent=1 // pred_fallthru
      _
    // Predicated region
    $region10: #{net_forward.1} parent=1 // pred_check
      _
    $region11: #{net_forward.1} parent=1 // pred_check_branch
      %20 = sbr.rel (0) target = $region13
    $region12: #{net_forward.1} parent=1 // pred_region
      _
    $region13: #{net_forward.1} parent=1 // pred_fallthru
      _
    // Predicated region
    $region14: #{net_forward.1} parent=1 // pred_check
      _
    $region15: #{net_forward.1} parent=1 // pred_check_branch
      %22 = sbr.rel (0) target = $region17
    $region16: #{net_forward.1} parent=1 // pred_region
      _
    $region17: #{net_forward.1} parent=1 // pred_fallthru
      _
    // Predicated region
    $region18: #{net_forward.1} parent=1 // pred_check
      _
    $region19: #{net_forward.1} parent=1 // pred_check_branch
      %24 = sbr.rel (0) target = $region21
    $region20: #{net_forward.1} parent=1 // pred_region
      _
    $region21: #{net_forward.1} parent=1 // pred_fallthru
      _
    // Predicated region
    $region22: #{net_forward.1} parent=1 // pred_check
      _
    $region23: #{net_forward.1} parent=1 // pred_check_branch
      %26 = sbr.rel (0) target = $region25
    $region24: #{net_forward.1} parent=1 // pred_region
      _
    $region25: #{net_forward.1} parent=1 // pred_fallthru
      _
    // Predicated region
    $region26: #{net_forward.1} parent=1 // pred_check
      _
    $region27: #{net_forward.1} parent=1 // pred_check_branch
      %28 = sbr.rel (0) target = $region29
    $region28: #{net_forward.1} parent=1 // pred_region
      _
    $region29: #{net_forward.1} parent=1 // pred_fallthru
      _
    // Predicated region
    $region30: #{net_forward.1} parent=1 // pred_check
      _
    $region31: #{net_forward.1} parent=1 // pred_check_branch
      %30 = sbr.rel (0) target = $region33
    $region32: #{net_forward.1} parent=1 // pred_region
      _
    $region33: #{net_forward.1} parent=1 // pred_fallthru
      _
    // Predicated region
    $region34: #{net_forward.1} parent=1 // pred_check
      _
    $region35: #{net_forward.1} parent=1 // pred_check_branch
      %32 = sbr.rel (0) target = $region37
    $region36: #{net_forward.1} parent=1 // pred_region
      _
    $region37: #{net_forward.1} parent=1 // pred_fallthru
      _
    %v34 = vld [vmem:[%s0] sm:$0xff]
    %v35 = vld [vmem:[%s0 + $0x8] sm:$0xff]
    %v36 = vld [vmem:[%s0 + $0x10] sm:$0xff]
    %v37 = vld [vmem:[%s0 + $0x1] sm:$0xff]
    %v38 = vld [vmem:[%s0 + $0x9] sm:$0xff]
    %v39 = vld [vmem:[%s0 + $0x11] sm:$0xff]
    %v40 = vld [vmem:[%s0 + $0x2] sm:$0xff]
    %v41 = vld [vmem:[%s0 + $0xa] sm:$0xff]
    %v42 = vld [vmem:[%s0 + $0x12] sm:$0xff]
    %v43 = vld [vmem:[%s0 + $0x3] sm:$0xff]
    %v44 = vld [vmem:[%s0 + $0xb] sm:$0xff]
    %v45 = vld [vmem:[%s0 + $0x13] sm:$0xff]
    %v46 = vld [vmem:[%s0 + $0x4] sm:$0xff]
    %v47 = vld [vmem:[%s0 + $0xc] sm:$0xff]
    %v48 = vld [vmem:[%s0 + $0x14] sm:$0xff]
    %52 = vrot.lane.b32.xlu0 %v37, 28
    %v53 = vpop.permute.xlu0 %52
    %54 = vrot.lane.b32.xlu0 %v38, 28
    %v55 = vpop.permute.xlu0 %54
    %56 = vrot.lane.b32.xlu0 %v39, 28
    %v57 = vpop.permute.xlu0 %56
    %64 = vrot.lane.b32.xlu0 %v40, 56
    %v65 = vpop.permute.xlu0 %64
    %66 = vrot.lane.b32.xlu0 %v41, 56
    %v67 = vpop.permute.xlu0 %66
    %68 = vrot.lane.b32.xlu0 %v42, 56
    %v69 = vpop.permute.xlu0 %68
    %76 = vrot.lane.b32.xlu0 %v43, 84
    %v77 = vpop.permute.xlu0 %76
    %78 = vrot.lane.b32.xlu0 %v44, 84
    %v79 = vpop.permute.xlu0 %78
    %80 = vrot.lane.b32.xlu0 %v45, 84
    %v81 = vpop.permute.xlu0 %80
    %88 = vrot.lane.b32.xlu0 %v46, 112
    %v89 = vpop.permute.xlu0 %88
    %90 = vrot.lane.b32.xlu0 %v47, 112
    %v91 = vpop.permute.xlu0 %90
    %92 = vrot.lane.b32.xlu0 %v48, 112
    %v93 = vpop.permute.xlu0 %92
    %vm97 = vcmask 228352
    %v98 = vsel %vm97, %v34, %v53
    %v99 = vsel %vm97, %v35, %v55
    %v100 = vsel %vm97, %v36, %v57
    %vm101 = vcmask 457728
    %v102 = vsel %vm101, %v98, %v65
    %v103 = vsel %vm101, %v99, %v67
    %v104 = vsel %vm101, %v100, %v69
    %vm105 = vcmask 687104
    %v106 = vsel %vm105, %v102, %v77
    %v107 = vsel %vm105, %v103, %v79
    %v108 = vsel %vm105, %v104, %v81
    %vm109 = vcmask 916480
    %v110 = vsel %vm109, %v106, %v89
    %v111 = vsel %vm109, %v107, %v91
    %v112 = vsel %vm109, %v108, %v93
    %v113 = vld [vmem:[%s0 + $0x1c] sm:$0xff]
    %v114 = vld [vmem:[%s0 + $0x24] sm:$0xff]
    %v115 = vld [vmem:[%s0 + $0x2c] sm:$0xff]
    %v116 = vld [vmem:[%s0 + $0x1d] sm:$0xff]
    %v117 = vld [vmem:[%s0 + $0x25] sm:$0xff]
    %v118 = vld [vmem:[%s0 + $0x2d] sm:$0xff]
    %v119 = vld [vmem:[%s0 + $0x1e] sm:$0xff]
    %v120 = vld [vmem:[%s0 + $0x26] sm:$0xff]
    %v121 = vld [vmem:[%s0 + $0x2e] sm:$0xff]
    %v122 = vld [vmem:[%s0 + $0x1f] sm:$0xff]
    %v123 = vld [vmem:[%s0 + $0x27] sm:$0xff]
    %v124 = vld [vmem:[%s0 + $0x2f] sm:$0xff]
    %v125 = vld [vmem:[%s0 + $0x20] sm:$0xff]
    %v126 = vld [vmem:[%s0 + $0x28] sm:$0xff]
    %v127 = vld [vmem:[%s0 + $0x30] sm:$0xff]
    %131 = vrot.lane.b32.xlu0 %v116, 28
    %v132 = vpop.permute.xlu0 %131
    %133 = vrot.lane.b32.xlu0 %v117, 28
    %v134 = vpop.permute.xlu0 %133
    %135 = vrot.lane.b32.xlu0 %v118, 28
    %v136 = vpop.permute.xlu0 %135
    %143 = vrot.lane.b32.xlu0 %v119, 56
    %v144 = vpop.permute.xlu0 %143
    %145 = vrot.lane.b32.xlu0 %v120, 56
    %v146 = vpop.permute.xlu0 %145
    %147 = vrot.lane.b32.xlu0 %v121, 56
    %v148 = vpop.permute.xlu0 %147
    %155 = vrot.lane.b32.xlu0 %v122, 84
    %v156 = vpop.permute.xlu0 %155
    %157 = vrot.lane.b32.xlu0 %v123, 84
    %v158 = vpop.permute.xlu0 %157
    %159 = vrot.lane.b32.xlu0 %v124, 84
    %v160 = vpop.permute.xlu0 %159
    %167 = vrot.lane.b32.xlu0 %v125, 112
    %v168 = vpop.permute.xlu0 %167
    %169 = vrot.lane.b32.xlu0 %v126, 112
    %v170 = vpop.permute.xlu0 %169
    %171 = vrot.lane.b32.xlu0 %v127, 112
    %v172 = vpop.permute.xlu0 %171
    %v176 = vsel %vm97, %v113, %v132
    %v177 = vsel %vm97, %v114, %v134
    %v178 = vsel %vm97, %v115, %v136
    %v179 = vsel %vm101, %v176, %v144
    %v180 = vsel %vm101, %v177, %v146
    %v181 = vsel %vm101, %v178, %v148
    %v182 = vsel %vm105, %v179, %v156
    %v183 = vsel %vm105, %v180, %v158
    %v184 = vsel %vm105, %v181, %v160
    %v185 = vsel %vm109, %v182, %v168
    %v186 = vsel %vm109, %v183, %v170
    %v187 = vsel %vm109, %v184, %v172
    %v188 = vpack.c.bf16 %v111, %v110
    %v189 = vpack.c.bf16 %v91, %v89
    %v190 = vpack.c.bf16 %v185, %v112
    %v191 = vpack.c.bf16 %v168, %v93
    %v192 = vpack.c.bf16 %v187, %v186
    %v193 = vpack.c.bf16 %v172, %v170
    %v194 = vld [vmem:[%s1] sm:$0xff]
    %v195 = vld [vmem:[%s1 + $0x8] sm:$0xff]
    %v196 = vld [vmem:[%s1 + $0x10] sm:$0xff]
    %v197 = vld [vmem:[%s1 + $0x18] sm:$0xff]
    %v198 = vld [vmem:[%s1 + $0x20] sm:$0xff]
    %v199 = vld [vmem:[%s1 + $0x28] sm:$0xff]
    %v200 = vld [vmem:[%s1 + $0x30] sm:$0xff]
    %v201 = vld [vmem:[%s1 + $0x38] sm:$0xff]
    %v202 = vld [vmem:[%s1 + $0x40] sm:$0xff]
    %v203 = vld [vmem:[%s1 + $0x48] sm:$0xff]
    %v204 = vld [vmem:[%s1 + $0x50] sm:$0xff]
    %v205 = vld [vmem:[%s1 + $0x58] sm:$0xff]
    %v206 = vld [vmem:[%s1 + $0x60] sm:$0xff]
    %v207 = vld [vmem:[%s1 + $0x68] sm:$0xff]
    %v208 = vld [vmem:[%s1 + $0x70] sm:$0xff]
    %v209 = vld [vmem:[%s1 + $0x78] sm:$0xff]
    %v210 = vld [vmem:[%s1 + $0x80] sm:$0xff]
    %v211 = vld [vmem:[%s1 + $0x88] sm:$0xff]
    %v212 = vld [vmem:[%s1 + $0x90] sm:$0xff]
    %v213 = vld [vmem:[%s1 + $0x98] sm:$0xff]
    %v214 = vld [vmem:[%s1 + $0xa0] sm:$0xff]
    %v215 = vld [vmem:[%s1 + $0xa8] sm:$0xff]
    %v216 = vld [vmem:[%s1 + $0xb0] sm:$0xff]
    %v217 = vld [vmem:[%s1 + $0xb8] sm:$0xff]
    %v218 = vld [vmem:[%s1 + $0xc0] sm:$0xff]
    %v219 = vld [vmem:[%s1 + $0xc8] sm:$0xff]
    %v220 = vld [vmem:[%s1 + $0xd0] sm:$0xff]
    %v221 = vld [vmem:[%s1 + $0xd8] sm:$0xff]
    %v222 = vld [vmem:[%s1 + $0xe0] sm:$0xff]
    %v223 = vld [vmem:[%s1 + $0xe8] sm:$0xff]
    %v224 = vld [vmem:[%s1 + $0xf0] sm:$0xff]
    %v225 = vld [vmem:[%s1 + $0xf8] sm:$0xff]
    %v226 = vld [vmem:[%s1 + $0x100] sm:$0xff]
    %v227 = vld [vmem:[%s1 + $0x108] sm:$0xff]
    %v228 = vld [vmem:[%s1 + $0x110] sm:$0xff]
    %v229 = vld [vmem:[%s1 + $0x118] sm:$0xff]
    %v230 = vld [vmem:[%s1 + $0x120] sm:$0xff]
    %v231 = vld [vmem:[%s1 + $0x128] sm:$0xff]
    %v232 = vld [vmem:[%s1 + $0x130] sm:$0xff]
    %v233 = vld [vmem:[%s1 + $0x138] sm:$0xff]
    %v234 = vld [vmem:[%s1 + $0x140] sm:$0xff]
    %v235 = vld [vmem:[%s1 + $0x148] sm:$0xff]
    %v236 = vld [vmem:[%s1 + $0x150] sm:$0xff]
    %v237 = vld [vmem:[%s1 + $0x158] sm:$0xff]
    %v238 = vld [vmem:[%s1 + $0x160] sm:$0xff]
    %v239 = vld [vmem:[%s1 + $0x168] sm:$0xff]
    %v240 = vld [vmem:[%s1 + $0x170] sm:$0xff]
    %v241 = vld [vmem:[%s1 + $0x178] sm:$0xff]
    %v242 = vld [vmem:[%s1 + $0x180] sm:$0xff]
    %v243 = vld [vmem:[%s1 + $0x188] sm:$0xff]
    %v244 = vld [vmem:[%s1 + $0x190] sm:$0xff]
    %v245 = vld [vmem:[%s1 + $0x198] sm:$0x33]
    %v246 = vld [vmem:[%s1 + $0x1a0] sm:$0x33]
    %v247 = vld [vmem:[%s1 + $0x1a8] sm:$0x33]
    %v248 = vld [vmem:[%s2] sm:$0x3f]
    %v250 = vlaneseq
    %v251 = vshrl.u32 %v250, 7
    %v252 = vsub.s32 0, %v251
    %v253 = vrot.slane %v248, %v252
    %v254 = vlaneseq
    %v255 = vshrl.u32 %v254, 7
    %v256 = vsub.s32 1, %v255
    %v257 = vrot.slane %v248, %v256
    %v258 = vlaneseq
    %v259 = vshrl.u32 %v258, 7
    %v260 = vsub.s32 2, %v259
    %v261 = vrot.slane %v248, %v260
    %v262 = vlaneseq
    %v263 = vshrl.u32 %v262, 7
    %v264 = vsub.s32 3, %v263
    %v265 = vrot.slane %v248, %v264
    %v266 = vlaneseq
    %v267 = vshrl.u32 %v266, 7
    %v268 = vsub.s32 4, %v267
    %v269 = vrot.slane %v248, %v268
    %v270 = vlaneseq
    %v271 = vshrl.u32 %v270, 7
    %v272 = vsub.s32 5, %v271
    %v273 = vrot.slane %v248, %v272
    %v334 = vunpack.c.l.b16 %v194
    %v335 = vunpack.c.h.b16 %v194
    %v336 = vunpack.c.l.b16 %v195
    %v337 = vunpack.c.h.b16 %v195
    %v338 = vunpack.c.l.b16 %v196
    %v339 = vunpack.c.h.b16 %v196
    %v340 = vunpack.c.l.b16 %v197
    %v341 = vunpack.c.h.b16 %v197
    %v342 = vunpack.c.l.b16 %v198
    %v343 = vunpack.c.h.b16 %v198
    %v344 = vunpack.c.l.b16 %v199
    %v345 = vunpack.c.h.b16 %v199
    %v346 = vunpack.c.l.b16 %v200
    %v347 = vunpack.c.h.b16 %v200
    %v348 = vunpack.c.l.b16 %v201
    %v349 = vunpack.c.h.b16 %v201
    %v350 = vunpack.c.l.b16 %v202
    %v351 = vunpack.c.h.b16 %v202
    %v352 = vunpack.c.l.b16 %v203
    %v353 = vunpack.c.h.b16 %v203
    %v354 = vunpack.c.l.b16 %v204
    %v355 = vunpack.c.h.b16 %v204
    %v356 = vunpack.c.l.b16 %v205
    %v357 = vunpack.c.h.b16 %v205
    %v358 = vunpack.c.l.b16 %v206
    %v359 = vunpack.c.h.b16 %v206
    %v360 = vunpack.c.l.b16 %v207
    %v361 = vunpack.c.h.b16 %v207
    %v362 = vunpack.c.l.b16 %v208
    %v363 = vunpack.c.h.b16 %v208
    %v364 = vunpack.c.l.b16 %v209
    %v365 = vunpack.c.h.b16 %v209
    %v366 = vunpack.c.l.b16 %v210
    %v367 = vunpack.c.h.b16 %v210
    %v368 = vunpack.c.l.b16 %v211
    %v369 = vunpack.c.h.b16 %v211
    %v370 = vunpack.c.l.b16 %v212
    %v371 = vunpack.c.h.b16 %v212
    %v372 = vunpack.c.l.b16 %v213
    %v373 = vunpack.c.h.b16 %v213
    %v374 = vunpack.c.l.b16 %v214
    %v375 = vunpack.c.h.b16 %v214
    %v376 = vunpack.c.l.b16 %v215
    %v377 = vunpack.c.h.b16 %v215
    %v378 = vunpack.c.l.b16 %v216
    %v379 = vunpack.c.h.b16 %v216
    %v380 = vunpack.c.l.b16 %v217
    %v381 = vunpack.c.h.b16 %v217
    %v382 = vunpack.c.l.b16 %v218
    %v383 = vunpack.c.h.b16 %v218
    %v384 = vunpack.c.l.b16 %v219
    %v385 = vunpack.c.h.b16 %v219
    %v386 = vunpack.c.l.b16 %v220
    %v387 = vunpack.c.h.b16 %v220
    %v388 = vunpack.c.l.b16 %v221
    %v389 = vunpack.c.h.b16 %v221
    %v390 = vunpack.c.l.b16 %v222
    %v391 = vunpack.c.h.b16 %v222
    %v392 = vunpack.c.l.b16 %v223
    %v393 = vunpack.c.h.b16 %v223
    %v394 = vunpack.c.l.b16 %v224
    %v395 = vunpack.c.h.b16 %v224
    %v396 = vunpack.c.l.b16 %v225
    %v397 = vunpack.c.h.b16 %v225
    %v398 = vunpack.c.l.b16 %v226
    %v399 = vunpack.c.h.b16 %v226
    %v400 = vunpack.c.l.b16 %v227
    %v401 = vunpack.c.h.b16 %v227
    %v402 = vunpack.c.l.b16 %v228
    %v403 = vunpack.c.h.b16 %v228
    %v404 = vunpack.c.l.b16 %v229
    %v405 = vunpack.c.h.b16 %v229
    %v406 = vunpack.c.l.b16 %v230
    %v407 = vunpack.c.h.b16 %v230
    %v408 = vunpack.c.l.b16 %v231
    %v409 = vunpack.c.h.b16 %v231
    %v410 = vunpack.c.l.b16 %v232
    %v411 = vunpack.c.h.b16 %v232
    %v412 = vunpack.c.l.b16 %v233
    %v413 = vunpack.c.h.b16 %v233
    %v414 = vunpack.c.l.b16 %v234
    %v415 = vunpack.c.h.b16 %v234
    %v416 = vunpack.c.l.b16 %v235
    %v417 = vunpack.c.h.b16 %v235
    %v418 = vunpack.c.l.b16 %v236
    %v419 = vunpack.c.h.b16 %v236
    %v420 = vunpack.c.l.b16 %v237
    %v421 = vunpack.c.h.b16 %v237
    %v422 = vunpack.c.l.b16 %v238
    %v423 = vunpack.c.h.b16 %v238
    %v424 = vunpack.c.l.b16 %v239
    %v425 = vunpack.c.h.b16 %v239
    %v426 = vunpack.c.l.b16 %v240
    %v427 = vunpack.c.h.b16 %v240
    %v428 = vunpack.c.l.b16 %v241
    %v429 = vunpack.c.h.b16 %v241
    %v430 = vunpack.c.l.b16 %v242
    %v431 = vunpack.c.h.b16 %v242
    %v432 = vunpack.c.l.b16 %v243
    %v433 = vunpack.c.h.b16 %v243
    %v434 = vunpack.c.l.b16 %v244
    %v435 = vunpack.c.h.b16 %v244
    %v436 = vunpack.c.l.b16 %v245
    %v437 = vunpack.c.h.b16 %v245
    %v438 = vunpack.c.l.b16 %v246
    %v439 = vunpack.c.h.b16 %v246
    %v440 = vunpack.c.l.b16 %v247
    %v441 = vunpack.c.h.b16 %v247
    %v442 = vpack.c.b16 %v340, %v334
    %v443 = vpack.c.b16 %v341, %v335
    %v444 = vpack.c.b16 %v342, %v336
    %v445 = vpack.c.b16 %v343, %v337
    %v446 = vpack.c.b16 %v344, %v338
    %v447 = vpack.c.b16 %v345, %v339
    %v448 = vpack.c.b16 %v352, %v346
    %v449 = vpack.c.b16 %v353, %v347
    %v450 = vpack.c.b16 %v354, %v348
    %v451 = vpack.c.b16 %v355, %v349
    %v452 = vpack.c.b16 %v356, %v350
    %v453 = vpack.c.b16 %v357, %v351
    %v454 = vpack.c.b16 %v364, %v358
    %v455 = vpack.c.b16 %v365, %v359
    %v456 = vpack.c.b16 %v366, %v360
    %v457 = vpack.c.b16 %v367, %v361
    %v458 = vpack.c.b16 %v368, %v362
    %v459 = vpack.c.b16 %v369, %v363
    %v460 = vpack.c.b16 %v376, %v370
    %v461 = vpack.c.b16 %v377, %v371
    %v462 = vpack.c.b16 %v378, %v372
    %v463 = vpack.c.b16 %v379, %v373
    %v464 = vpack.c.b16 %v380, %v374
    %v465 = vpack.c.b16 %v381, %v375
    %v466 = vpack.c.b16 %v388, %v382
    %v467 = vpack.c.b16 %v389, %v383
    %v468 = vpack.c.b16 %v390, %v384
    %v469 = vpack.c.b16 %v391, %v385
    %v470 = vpack.c.b16 %v392, %v386
    %v471 = vpack.c.b16 %v393, %v387
    %v472 = vpack.c.b16 %v400, %v394
    %v473 = vpack.c.b16 %v401, %v395
    %v474 = vpack.c.b16 %v402, %v396
    %v475 = vpack.c.b16 %v403, %v397
    %v476 = vpack.c.b16 %v404, %v398
    %v477 = vpack.c.b16 %v405, %v399
    %v478 = vpack.c.b16 %v412, %v406
    %v479 = vpack.c.b16 %v413, %v407
    %v480 = vpack.c.b16 %v414, %v408
    %v481 = vpack.c.b16 %v415, %v409
    %v482 = vpack.c.b16 %v416, %v410
    %v483 = vpack.c.b16 %v417, %v411
    %v484 = vpack.c.b16 %v424, %v418
    %v485 = vpack.c.b16 %v425, %v419
    %v486 = vpack.c.b16 %v426, %v420
    %v487 = vpack.c.b16 %v427, %v421
    %v488 = vpack.c.b16 %v428, %v422
    %v489 = vpack.c.b16 %v429, %v423
    %v490 = vpack.c.b16 %v436, %v430
    %v491 = vpack.c.b16 %v437, %v431
    %v492 = vpack.c.b16 %v438, %v432
    %v493 = vpack.c.b16 %v439, %v433
    %v494 = vpack.c.b16 %v440, %v434
    %v495 = vpack.c.b16 %v441, %v435
    %vm544 = vcmask 97280
    %v546 = vsel %vm544, %v189, 0
    %v549 = vsel %vm544, %v191, 0
    %v552 = vsel %vm544, %v193, 0
    %vm554 = vcmask 1045504
    %v556 = vsel %vm554, %v490, 0
    %v559 = vsel %vm554, %v491, 0
    %v562 = vsel %vm554, %v492, 0
    %v565 = vsel %vm554, %v493, 0
    %v568 = vsel %vm554, %v494, 0
    %v571 = vsel %vm554, %v495, 0
    %573 = vmatprep.subr.bf16.mxu0 %v443
    %574 = vmatpush1.bf16.msra.mxu0 %v442
    %575 = vmatprep.subr.bf16.mxu0 %v449
    %576 = vmatpush1.bf16.msra.mxu0 %v448
    %577 = vmatprep.subr.bf16.mxu0 %v455
    %578 = vmatpush1.bf16.msra.mxu0 %v454
    %579 = vmatprep.subr.bf16.mxu0 %v461
    %580 = vmatpush1.bf16.msra.mxu0 %v460
    %581 = vmatprep.subr.bf16.mxu0 %v467
    %582 = vmatpush1.bf16.msra.mxu0 %v466
    %583 = vmatprep.subr.bf16.mxu0 %v473
    %584 = vmatpush1.bf16.msra.mxu0 %v472
    %585 = vmatprep.subr.bf16.mxu0 %v479
    %586 = vmatpush1.bf16.msra.mxu0 %v478
    %587 = vmatprep.subr.bf16.mxu0 %v485
    %588 = vmatpush1.bf16.msra.mxu0 %v484
    %589 = vmatprep.subr.bf16.mxu0 %v559
    %590 = vmatpush1.bf16.msra.mxu0 %v556
    %591 = vmatprep.subr.bf16.mxu0 0
    %592 = vmatpush1.bf16.msra.mxu0 0
    %593 = vmatprep.subr.bf16.mxu0 0
    %594 = vmatpush1.bf16.msra.mxu0 0
    %595 = vmatprep.subr.bf16.mxu0 0
    %596 = vmatpush1.bf16.msra.mxu0 0
    %597 = vmatprep.subr.bf16.mxu0 0
    %598 = vmatpush1.bf16.msra.mxu0 0
    %599 = vmatprep.subr.bf16.mxu0 0
    %600 = vmatpush1.bf16.msra.mxu0 0
    %601 = vmatprep.subr.bf16.mxu0 0
    %602 = vmatpush1.bf16.msra.mxu0 0
    %603 = vmatprep.subr.bf16.mxu0 0
    %604 = vmatpush1.bf16.msra.mxu0 0
    %605 = vmatprep.mubr.bf16.mxu0 %v546
    %606 = vmatmul.mubr.bf16.gmra.mrb[0].mxu0 %v188
    %v607 = vpop.f32.mrb[0].mxu0
    %v608 = vadd.f32 %v253, %v607
    %v609 = vpop.f32.mrb[0].mxu0
    %v610 = vadd.f32 %v257, %v609
    %v611 = vpop.f32.mrb[0].mxu0
    %v612 = vadd.f32 %v253, %v611
    %v613 = vpop.f32.mrb[0].mxu0
    %v614 = vadd.f32 %v257, %v613
    %615 = vmatprep.mubr.bf16.mxu0 %v549
    %616 = vmatmul.mubr.bf16.gmra.mrb[0].mxu0 %v190
    %v617 = vpop.f32.mrb[0].mxu0
    %v618 = vadd.f32 %v253, %v617
    %v619 = vpop.f32.mrb[0].mxu0
    %v620 = vadd.f32 %v257, %v619
    %v621 = vpop.f32.mrb[0].mxu0
    %v622 = vadd.f32 %v253, %v621
    %v623 = vpop.f32.mrb[0].mxu0
    %v624 = vadd.f32 %v257, %v623
    %625 = vmatprep.mubr.bf16.mxu0 %v552
    %626 = vmatmul.mubr.bf16.gmra.mrb[0].mxu0 %v192
    %v627 = vpop.f32.mrb[0].mxu0
    %v628 = vadd.f32 %v253, %v627
    %v629 = vpop.f32.mrb[0].mxu0
    %v630 = vadd.f32 %v257, %v629
    %v631 = vpop.f32.mrb[0].mxu0
    %v632 = vadd.f32 %v253, %v631
    %v633 = vpop.f32.mrb[0].mxu0
    %v634 = vadd.f32 %v257, %v633
    %635 = vdwg.mxu0
    %636 = vmatprep.subr.bf16.mxu0 %v445
    %637 = vmatpush1.bf16.msra.mxu0 %v444
    %638 = vmatprep.subr.bf16.mxu0 %v451
    %639 = vmatpush1.bf16.msra.mxu0 %v450
    %640 = vmatprep.subr.bf16.mxu0 %v457
    %641 = vmatpush1.bf16.msra.mxu0 %v456
    %642 = vmatprep.subr.bf16.mxu0 %v463
    %643 = vmatpush1.bf16.msra.mxu0 %v462
    %644 = vmatprep.subr.bf16.mxu0 %v469
    %645 = vmatpush1.bf16.msra.mxu0 %v468
    %646 = vmatprep.subr.bf16.mxu0 %v475
    %647 = vmatpush1.bf16.msra.mxu0 %v474
    %648 = vmatprep.subr.bf16.mxu0 %v481
    %649 = vmatpush1.bf16.msra.mxu0 %v480
    %650 = vmatprep.subr.bf16.mxu0 %v487
    %651 = vmatpush1.bf16.msra.mxu0 %v486
    %652 = vmatprep.subr.bf16.mxu0 %v565
    %653 = vmatpush1.bf16.msra.mxu0 %v562
    %654 = vmatprep.subr.bf16.mxu0 0
    %655 = vmatpush1.bf16.msra.mxu0 0
    %656 = vmatprep.subr.bf16.mxu0 0
    %657 = vmatpush1.bf16.msra.mxu0 0
    %658 = vmatprep.subr.bf16.mxu0 0
    %659 = vmatpush1.bf16.msra.mxu0 0
    %660 = vmatprep.subr.bf16.mxu0 0
    %661 = vmatpush1.bf16.msra.mxu0 0
    %662 = vmatprep.subr.bf16.mxu0 0
    %663 = vmatpush1.bf16.msra.mxu0 0
    %664 = vmatprep.subr.bf16.mxu0 0
    %665 = vmatpush1.bf16.msra.mxu0 0
    %666 = vmatprep.subr.bf16.mxu0 0
    %667 = vmatpush1.bf16.msra.mxu0 0
    %668 = vmatprep.mubr.bf16.mxu0 %v546
    %669 = vmatmul.mubr.bf16.gmra.mrb[0].mxu0 %v188
    %v670 = vpop.f32.mrb[0].mxu0
    %v671 = vadd.f32 %v261, %v670
    %v672 = vpop.f32.mrb[0].mxu0
    %v673 = vadd.f32 %v265, %v672
    %v674 = vpop.f32.mrb[0].mxu0
    %v675 = vadd.f32 %v261, %v674
    %v676 = vpop.f32.mrb[0].mxu0
    %v677 = vadd.f32 %v265, %v676
    %678 = vmatprep.mubr.bf16.mxu0 %v549
    %679 = vmatmul.mubr.bf16.gmra.mrb[0].mxu0 %v190
    %v680 = vpop.f32.mrb[0].mxu0
    %v681 = vadd.f32 %v261, %v680
    %v682 = vpop.f32.mrb[0].mxu0
    %v683 = vadd.f32 %v265, %v682
    %v684 = vpop.f32.mrb[0].mxu0
    %v685 = vadd.f32 %v261, %v684
    %v686 = vpop.f32.mrb[0].mxu0
    %v687 = vadd.f32 %v265, %v686
    %688 = vmatprep.mubr.bf16.mxu0 %v552
    %689 = vmatmul.mubr.bf16.gmra.mrb[0].mxu0 %v192
    %v690 = vpop.f32.mrb[0].mxu0
    %v691 = vadd.f32 %v261, %v690
    %v692 = vpop.f32.mrb[0].mxu0
    %v693 = vadd.f32 %v265, %v692
    %v694 = vpop.f32.mrb[0].mxu0
    %v695 = vadd.f32 %v261, %v694
    %v696 = vpop.f32.mrb[0].mxu0
    %v697 = vadd.f32 %v265, %v696
    %698 = vdwg.mxu0
    %699 = vmatprep.subr.bf16.mxu0 %v447
    %700 = vmatpush1.bf16.msra.mxu0 %v446
    %701 = vmatprep.subr.bf16.mxu0 %v453
    %702 = vmatpush1.bf16.msra.mxu0 %v452
    %703 = vmatprep.subr.bf16.mxu0 %v459
    %704 = vmatpush1.bf16.msra.mxu0 %v458
    %705 = vmatprep.subr.bf16.mxu0 %v465
    %706 = vmatpush1.bf16.msra.mxu0 %v464
    %707 = vmatprep.subr.bf16.mxu0 %v471
    %708 = vmatpush1.bf16.msra.mxu0 %v470
    %709 = vmatprep.subr.bf16.mxu0 %v477
    %710 = vmatpush1.bf16.msra.mxu0 %v476
    %711 = vmatprep.subr.bf16.mxu0 %v483
    %712 = vmatpush1.bf16.msra.mxu0 %v482
    %713 = vmatprep.subr.bf16.mxu0 %v489
    %714 = vmatpush1.bf16.msra.mxu0 %v488
    %715 = vmatprep.subr.bf16.mxu0 %v571
    %716 = vmatpush1.bf16.msra.mxu0 %v568
    %717 = vmatprep.subr.bf16.mxu0 0
    %718 = vmatpush1.bf16.msra.mxu0 0
    %719 = vmatprep.subr.bf16.mxu0 0
    %720 = vmatpush1.bf16.msra.mxu0 0
    %721 = vmatprep.subr.bf16.mxu0 0
    %722 = vmatpush1.bf16.msra.mxu0 0
    %723 = vmatprep.subr.bf16.mxu0 0
    %724 = vmatpush1.bf16.msra.mxu0 0
    %725 = vmatprep.subr.bf16.mxu0 0
    %726 = vmatpush1.bf16.msra.mxu0 0
    %727 = vmatprep.subr.bf16.mxu0 0
    %728 = vmatpush1.bf16.msra.mxu0 0
    %729 = vmatprep.subr.bf16.mxu0 0
    %730 = vmatpush1.bf16.msra.mxu0 0
    %731 = vmatprep.mubr.bf16.mxu0 %v546
    %732 = vmatmul.mubr.bf16.gmra.mrb[0].mxu0 %v188
    %v733 = vpop.f32.mrb[0].mxu0
    %v734 = vadd.f32 %v269, %v733
    %v735 = vpop.f32.mrb[0].mxu0
    %v736 = vadd.f32 %v273, %v735
    %v737 = vpop.f32.mrb[0].mxu0
    %v738 = vadd.f32 %v269, %v737
    %v739 = vpop.f32.mrb[0].mxu0
    %v740 = vadd.f32 %v273, %v739
    %741 = vmatprep.mubr.bf16.mxu0 %v549
    %742 = vmatmul.mubr.bf16.gmra.mrb[0].mxu0 %v190
    %v743 = vpop.f32.mrb[0].mxu0
    %v744 = vadd.f32 %v269, %v743
    %v745 = vpop.f32.mrb[0].mxu0
    %v746 = vadd.f32 %v273, %v745
    %v747 = vpop.f32.mrb[0].mxu0
    %v748 = vadd.f32 %v269, %v747
    %v749 = vpop.f32.mrb[0].mxu0
    %v750 = vadd.f32 %v273, %v749
    %751 = vmatprep.mubr.bf16.mxu0 %v552
    %752 = vmatmul.mubr.bf16.gmra.mrb[0].mxu0 %v192
    %v753 = vpop.f32.mrb[0].mxu0
    %v754 = vadd.f32 %v269, %v753
    %v755 = vpop.f32.mrb[0].mxu0
    %v756 = vadd.f32 %v273, %v755
    %v757 = vpop.f32.mrb[0].mxu0
    %v758 = vadd.f32 %v269, %v757
    %v759 = vpop.f32.mrb[0].mxu0
    %v760 = vadd.f32 %v273, %v759
    %761 = vdwg.mxu0
    %768 = vrot.lane.b32.xlu0 %v608, 96
    %v769 = vpop.permute.xlu0 %768
    %770 = vrot.lane.b32.xlu0 %v612, 96
    %v771 = vpop.permute.xlu0 %770
    %772 = vrot.lane.b32.xlu0 %v618, 96
    %v773 = vpop.permute.xlu0 %772
    %774 = vrot.lane.b32.xlu0 %v622, 96
    %v775 = vpop.permute.xlu0 %774
    %776 = vrot.lane.b32.xlu0 %v628, 96
    %v777 = vpop.permute.xlu0 %776
    %778 = vrot.lane.b32.xlu0 %v632, 96
    %v779 = vpop.permute.xlu0 %778
    %v786 = vmax.f32 %v608, %v769
    %v787 = vmax.f32 %v612, %v771
    %v788 = vmax.f32 %v618, %v773
    %v789 = vmax.f32 %v622, %v775
    %v790 = vmax.f32 %v628, %v777
    %v791 = vmax.f32 %v632, %v779
    %792 = vrot.lane.b32.xlu0 %v608, 64
    %v793 = vpop.permute.xlu0 %792
    %794 = vrot.lane.b32.xlu0 %v612, 64
    %v795 = vpop.permute.xlu0 %794
    %796 = vrot.lane.b32.xlu0 %v618, 64
    %v797 = vpop.permute.xlu0 %796
    %798 = vrot.lane.b32.xlu0 %v622, 64
    %v799 = vpop.permute.xlu0 %798
    %800 = vrot.lane.b32.xlu0 %v628, 64
    %v801 = vpop.permute.xlu0 %800
    %802 = vrot.lane.b32.xlu0 %v632, 64
    %v803 = vpop.permute.xlu0 %802
    %v810 = vmax.f32 %v786, %v793
    %v811 = vmax.f32 %v787, %v795
    %v812 = vmax.f32 %v788, %v797
    %v813 = vmax.f32 %v789, %v799
    %v814 = vmax.f32 %v790, %v801
    %v815 = vmax.f32 %v791, %v803
    %822 = vrot.lane.b32.xlu0 %v610, 96
    %v823 = vpop.permute.xlu0 %822
    %824 = vrot.lane.b32.xlu0 %v614, 96
    %v825 = vpop.permute.xlu0 %824
    %826 = vrot.lane.b32.xlu0 %v620, 96
    %v827 = vpop.permute.xlu0 %826
    %828 = vrot.lane.b32.xlu0 %v624, 96
    %v829 = vpop.permute.xlu0 %828
    %830 = vrot.lane.b32.xlu0 %v630, 96
    %v831 = vpop.permute.xlu0 %830
    %832 = vrot.lane.b32.xlu0 %v634, 96
    %v833 = vpop.permute.xlu0 %832
    %v840 = vmax.f32 %v608, %v823
    %v841 = vmax.f32 %v612, %v825
    %v842 = vmax.f32 %v618, %v827
    %v843 = vmax.f32 %v622, %v829
    %v844 = vmax.f32 %v628, %v831
    %v845 = vmax.f32 %v632, %v833
    %846 = vrot.lane.b32.xlu0 %v610, 64
    %v847 = vpop.permute.xlu0 %846
    %848 = vrot.lane.b32.xlu0 %v614, 64
    %v849 = vpop.permute.xlu0 %848
    %850 = vrot.lane.b32.xlu0 %v620, 64
    %v851 = vpop.permute.xlu0 %850
    %852 = vrot.lane.b32.xlu0 %v624, 64
    %v853 = vpop.permute.xlu0 %852
    %854 = vrot.lane.b32.xlu0 %v630, 64
    %v855 = vpop.permute.xlu0 %854
    %856 = vrot.lane.b32.xlu0 %v634, 64
    %v857 = vpop.permute.xlu0 %856
    %v864 = vmax.f32 %v840, %v847
    %v865 = vmax.f32 %v841, %v849
    %v866 = vmax.f32 %v842, %v851
    %v867 = vmax.f32 %v843, %v853
    %v868 = vmax.f32 %v844, %v855
    %v869 = vmax.f32 %v845, %v857
    %v870 = vmax.f32 %v610, %v823
    %v871 = vmax.f32 %v614, %v825
    %v872 = vmax.f32 %v620, %v827
    %v873 = vmax.f32 %v624, %v829
    %v874 = vmax.f32 %v630, %v831
    %v875 = vmax.f32 %v634, %v833
    %882 = vrot.lane.b32.xlu0 %v671, 64
    %v883 = vpop.permute.xlu0 %882
    %884 = vrot.lane.b32.xlu0 %v675, 64
    %v885 = vpop.permute.xlu0 %884
    %886 = vrot.lane.b32.xlu0 %v681, 64
    %v887 = vpop.permute.xlu0 %886
    %888 = vrot.lane.b32.xlu0 %v685, 64
    %v889 = vpop.permute.xlu0 %888
    %890 = vrot.lane.b32.xlu0 %v691, 64
    %v891 = vpop.permute.xlu0 %890
    %892 = vrot.lane.b32.xlu0 %v695, 64
    %v893 = vpop.permute.xlu0 %892
    %v900 = vmax.f32 %v870, %v883
    %v901 = vmax.f32 %v871, %v885
    %v902 = vmax.f32 %v872, %v887
    %v903 = vmax.f32 %v873, %v889
    %v904 = vmax.f32 %v874, %v891
    %v905 = vmax.f32 %v875, %v893
    %906 = vrot.lane.b32.xlu0 %v671, 96
    %v907 = vpop.permute.xlu0 %906
    %908 = vrot.lane.b32.xlu0 %v675, 96
    %v909 = vpop.permute.xlu0 %908
    %910 = vrot.lane.b32.xlu0 %v681, 96
    %v911 = vpop.permute.xlu0 %910
    %912 = vrot.lane.b32.xlu0 %v685, 96
    %v913 = vpop.permute.xlu0 %912
    %914 = vrot.lane.b32.xlu0 %v691, 96
    %v915 = vpop.permute.xlu0 %914
    %916 = vrot.lane.b32.xlu0 %v695, 96
    %v917 = vpop.permute.xlu0 %916
    %v924 = vmax.f32 %v671, %v907
    %v925 = vmax.f32 %v675, %v909
    %v926 = vmax.f32 %v681, %v911
    %v927 = vmax.f32 %v685, %v913
    %v928 = vmax.f32 %v691, %v915
    %v929 = vmax.f32 %v695, %v917
    %v930 = vmax.f32 %v924, %v883
    %v931 = vmax.f32 %v925, %v885
    %v932 = vmax.f32 %v926, %v887
    %v933 = vmax.f32 %v927, %v889
    %v934 = vmax.f32 %v928, %v891
    %v935 = vmax.f32 %v929, %v893
    %942 = vrot.lane.b32.xlu0 %v673, 96
    %v943 = vpop.permute.xlu0 %942
    %944 = vrot.lane.b32.xlu0 %v677, 96
    %v945 = vpop.permute.xlu0 %944
    %946 = vrot.lane.b32.xlu0 %v683, 96
    %v947 = vpop.permute.xlu0 %946
    %948 = vrot.lane.b32.xlu0 %v687, 96
    %v949 = vpop.permute.xlu0 %948
    %950 = vrot.lane.b32.xlu0 %v693, 96
    %v951 = vpop.permute.xlu0 %950
    %952 = vrot.lane.b32.xlu0 %v697, 96
    %v953 = vpop.permute.xlu0 %952
    %v960 = vmax.f32 %v673, %v943
    %v961 = vmax.f32 %v677, %v945
    %v962 = vmax.f32 %v683, %v947
    %v963 = vmax.f32 %v687, %v949
    %v964 = vmax.f32 %v693, %v951
    %v965 = vmax.f32 %v697, %v953
    %966 = vrot.lane.b32.xlu0 %v673, 64
    %v967 = vpop.permute.xlu0 %966
    %968 = vrot.lane.b32.xlu0 %v677, 64
    %v969 = vpop.permute.xlu0 %968
    %970 = vrot.lane.b32.xlu0 %v683, 64
    %v971 = vpop.permute.xlu0 %970
    %972 = vrot.lane.b32.xlu0 %v687, 64
    %v973 = vpop.permute.xlu0 %972
    %974 = vrot.lane.b32.xlu0 %v693, 64
    %v975 = vpop.permute.xlu0 %974
    %976 = vrot.lane.b32.xlu0 %v697, 64
    %v977 = vpop.permute.xlu0 %976
    %v984 = vmax.f32 %v960, %v967
    %v985 = vmax.f32 %v961, %v969
    %v986 = vmax.f32 %v962, %v971
    %v987 = vmax.f32 %v963, %v973
    %v988 = vmax.f32 %v964, %v975
    %v989 = vmax.f32 %v965, %v977
    %996 = vrot.lane.b32.xlu0 %v734, 96
    %v997 = vpop.permute.xlu0 %996
    %998 = vrot.lane.b32.xlu0 %v738, 96
    %v999 = vpop.permute.xlu0 %998
    %1000 = vrot.lane.b32.xlu0 %v744, 96
    %v1001 = vpop.permute.xlu0 %1000
    %1002 = vrot.lane.b32.xlu0 %v748, 96
    %v1003 = vpop.permute.xlu0 %1002
    %1004 = vrot.lane.b32.xlu0 %v754, 96
    %v1005 = vpop.permute.xlu0 %1004
    %1006 = vrot.lane.b32.xlu0 %v758, 96
    %v1007 = vpop.permute.xlu0 %1006
    %v1014 = vmax.f32 %v673, %v997
    %v1015 = vmax.f32 %v677, %v999
    %v1016 = vmax.f32 %v683, %v1001
    %v1017 = vmax.f32 %v687, %v1003
    %v1018 = vmax.f32 %v693, %v1005
    %v1019 = vmax.f32 %v697, %v1007
    %1020 = vrot.lane.b32.xlu0 %v734, 64
    %v1021 = vpop.permute.xlu0 %1020
    %1022 = vrot.lane.b32.xlu0 %v738, 64
    %v1023 = vpop.permute.xlu0 %1022
    %1024 = vrot.lane.b32.xlu0 %v744, 64
    %v1025 = vpop.permute.xlu0 %1024
    %1026 = vrot.lane.b32.xlu0 %v748, 64
    %v1027 = vpop.permute.xlu0 %1026
    %1028 = vrot.lane.b32.xlu0 %v754, 64
    %v1029 = vpop.permute.xlu0 %1028
    %1030 = vrot.lane.b32.xlu0 %v758, 64
    %v1031 = vpop.permute.xlu0 %1030
    %v1038 = vmax.f32 %v1014, %v1021
    %v1039 = vmax.f32 %v1015, %v1023
    %v1040 = vmax.f32 %v1016, %v1025
    %v1041 = vmax.f32 %v1017, %v1027
    %v1042 = vmax.f32 %v1018, %v1029
    %v1043 = vmax.f32 %v1019, %v1031
    %v1044 = vmax.f32 %v734, %v997
    %v1045 = vmax.f32 %v738, %v999
    %v1046 = vmax.f32 %v744, %v1001
    %v1047 = vmax.f32 %v748, %v1003
    %v1048 = vmax.f32 %v754, %v1005
    %v1049 = vmax.f32 %v758, %v1007
    %1056 = vrot.lane.b32.xlu0 %v736, 64
    %v1057 = vpop.permute.xlu0 %1056
    %1058 = vrot.lane.b32.xlu0 %v740, 64
    %v1059 = vpop.permute.xlu0 %1058
    %1060 = vrot.lane.b32.xlu0 %v746, 64
    %v1061 = vpop.permute.xlu0 %1060
    %1062 = vrot.lane.b32.xlu0 %v750, 64
    %v1063 = vpop.permute.xlu0 %1062
    %1064 = vrot.lane.b32.xlu0 %v756, 64
    %v1065 = vpop.permute.xlu0 %1064
    %1066 = vrot.lane.b32.xlu0 %v760, 64
    %v1067 = vpop.permute.xlu0 %1066
    %v1074 = vmax.f32 %v1044, %v1057
    %v1075 = vmax.f32 %v1045, %v1059
    %v1076 = vmax.f32 %v1046, %v1061
    %v1077 = vmax.f32 %v1047, %v1063
    %v1078 = vmax.f32 %v1048, %v1065
    %v1079 = vmax.f32 %v1049, %v1067
    %1080 = vrot.lane.b32.xlu0 %v736, 96
    %v1081 = vpop.permute.xlu0 %1080
    %1082 = vrot.lane.b32.xlu0 %v740, 96
    %v1083 = vpop.permute.xlu0 %1082
    %1084 = vrot.lane.b32.xlu0 %v746, 96
    %v1085 = vpop.permute.xlu0 %1084
    %1086 = vrot.lane.b32.xlu0 %v750, 96
    %v1087 = vpop.permute.xlu0 %1086
    %1088 = vrot.lane.b32.xlu0 %v756, 96
    %v1089 = vpop.permute.xlu0 %1088
    %1090 = vrot.lane.b32.xlu0 %v760, 96
    %v1091 = vpop.permute.xlu0 %1090
    %v1098 = vmax.f32 %v736, %v1081
    %v1099 = vmax.f32 %v740, %v1083
    %v1100 = vmax.f32 %v746, %v1085
    %v1101 = vmax.f32 %v750, %v1087
    %v1102 = vmax.f32 %v756, %v1089
    %v1103 = vmax.f32 %v760, %v1091
    %v1104 = vmax.f32 %v1098, %v1057
    %v1105 = vmax.f32 %v1099, %v1059
    %v1106 = vmax.f32 %v1100, %v1061
    %v1107 = vmax.f32 %v1101, %v1063
    %v1108 = vmax.f32 %v1102, %v1065
    %v1109 = vmax.f32 %v1103, %v1067
    %1116 = vrot.lane.b32.xlu0 %v864, 64
    %v1117 = vpop.permute.xlu0 %1116
    %1118 = vrot.lane.b32.xlu0 %v865, 64
    %v1119 = vpop.permute.xlu0 %1118
    %1120 = vrot.lane.b32.xlu0 %v866, 64
    %v1121 = vpop.permute.xlu0 %1120
    %1122 = vrot.lane.b32.xlu0 %v867, 64
    %v1123 = vpop.permute.xlu0 %1122
    %1124 = vrot.lane.b32.xlu0 %v868, 64
    %v1125 = vpop.permute.xlu0 %1124
    %1126 = vrot.lane.b32.xlu0 %v869, 64
    %v1127 = vpop.permute.xlu0 %1126
    %1140 = vrot.lane.b32.xlu0 %v930, 64
    %v1141 = vpop.permute.xlu0 %1140
    %1142 = vrot.lane.b32.xlu0 %v931, 64
    %v1143 = vpop.permute.xlu0 %1142
    %1144 = vrot.lane.b32.xlu0 %v932, 64
    %v1145 = vpop.permute.xlu0 %1144
    %1146 = vrot.lane.b32.xlu0 %v933, 64
    %v1147 = vpop.permute.xlu0 %1146
    %1148 = vrot.lane.b32.xlu0 %v934, 64
    %v1149 = vpop.permute.xlu0 %1148
    %1150 = vrot.lane.b32.xlu0 %v935, 64
    %v1151 = vpop.permute.xlu0 %1150
    %1164 = vrot.lane.b32.xlu0 %v1038, 64
    %v1165 = vpop.permute.xlu0 %1164
    %1166 = vrot.lane.b32.xlu0 %v1039, 64
    %v1167 = vpop.permute.xlu0 %1166
    %1168 = vrot.lane.b32.xlu0 %v1040, 64
    %v1169 = vpop.permute.xlu0 %1168
    %1170 = vrot.lane.b32.xlu0 %v1041, 64
    %v1171 = vpop.permute.xlu0 %1170
    %1172 = vrot.lane.b32.xlu0 %v1042, 64
    %v1173 = vpop.permute.xlu0 %1172
    %1174 = vrot.lane.b32.xlu0 %v1043, 64
    %v1175 = vpop.permute.xlu0 %1174
    %1188 = vrot.lane.b32.xlu0 %v1104, 64
    %v1189 = vpop.permute.xlu0 %1188
    %1190 = vrot.lane.b32.xlu0 %v1105, 64
    %v1191 = vpop.permute.xlu0 %1190
    %1192 = vrot.lane.b32.xlu0 %v1106, 64
    %v1193 = vpop.permute.xlu0 %1192
    %1194 = vrot.lane.b32.xlu0 %v1107, 64
    %v1195 = vpop.permute.xlu0 %1194
    %1196 = vrot.lane.b32.xlu0 %v1108, 64
    %v1197 = vpop.permute.xlu0 %1196
    %1198 = vrot.lane.b32.xlu0 %v1109, 64
    %v1199 = vpop.permute.xlu0 %1198
    %vm1206 = vcmask 261120
    %v1207 = vsel %vm1206, %v810, %v1117
    %v1208 = vsel %vm1206, %v811, %v1119
    %v1209 = vsel %vm1206, %v812, %v1121
    %v1210 = vsel %vm1206, %v813, %v1123
    %v1211 = vsel %vm1206, %v814, %v1125
    %v1212 = vsel %vm1206, %v815, %v1127
    %vm1213 = vcmask 523264
    %v1214 = vsel %vm1213, %v1207, %v900
    %v1215 = vsel %vm1213, %v1208, %v901
    %v1216 = vsel %vm1213, %v1209, %v902
    %v1217 = vsel %vm1213, %v1210, %v903
    %v1218 = vsel %vm1213, %v1211, %v904
    %v1219 = vsel %vm1213, %v1212, %v905
    %vm1220 = vcmask 785408
    %v1221 = vsel %vm1220, %v1214, %v1141
    %v1222 = vsel %vm1220, %v1215, %v1143
    %v1223 = vsel %vm1220, %v1216, %v1145
    %v1224 = vsel %vm1220, %v1217, %v1147
    %v1225 = vsel %vm1220, %v1218, %v1149
    %v1226 = vsel %vm1220, %v1219, %v1151
    %v1227 = vsel %vm1206, %v984, %v1165
    %v1228 = vsel %vm1206, %v985, %v1167
    %v1229 = vsel %vm1206, %v986, %v1169
    %v1230 = vsel %vm1206, %v987, %v1171
    %v1231 = vsel %vm1206, %v988, %v1173
    %v1232 = vsel %vm1206, %v989, %v1175
    %v1233 = vsel %vm1213, %v1227, %v1074
    %v1234 = vsel %vm1213, %v1228, %v1075
    %v1235 = vsel %vm1213, %v1229, %v1076
    %v1236 = vsel %vm1213, %v1230, %v1077
    %v1237 = vsel %vm1213, %v1231, %v1078
    %v1238 = vsel %vm1213, %v1232, %v1079
    %v1239 = vsel %vm1220, %v1233, %v1189
    %v1240 = vsel %vm1220, %v1234, %v1191
    %v1241 = vsel %vm1220, %v1235, %v1193
    %v1242 = vsel %vm1220, %v1236, %v1195
    %v1243 = vsel %vm1220, %v1237, %v1197
    %v1244 = vsel %vm1220, %v1238, %v1199
    %vm1245 = vcmask 1042432
    %v1246 = vsel %vm1245, %v1221, -inf
    %v1247 = vrot.slane %v1246, 4
    %v1248 = vmax.f32 %v1246, %v1247
    %v1249 = vrot.slane %v1248, 2
    %v1250 = vmax.f32 %v1248, %v1249
    %v1251 = vrot.slane %v1250, 1
    %v1252 = vmax.f32 %v1250, %v1251
    %v1253 = vsel %vm1245, %v1239, -inf
    %v1254 = vrot.slane %v1253, 4
    %v1255 = vmax.f32 %v1253, %v1254
    %v1256 = vrot.slane %v1255, 2
    %v1257 = vmax.f32 %v1255, %v1256
    %v1258 = vrot.slane %v1257, 1
    %v1259 = vmax.f32 %v1257, %v1258
    %vm1260 = vcmask 1045507
    %v1261 = vsel %vm1260, %v1221, -inf
    %v1262 = vrot.slane %v1261, 4
    %v1263 = vmax.f32 %v1261, %v1262
    %v1264 = vrot.slane %v1263, 2
    %v1265 = vmax.f32 %v1263, %v1264
    %v1266 = vrot.slane %v1265, 1
    %v1267 = vmax.f32 %v1265, %v1266
    %v1268 = vsel %vm1260, %v1239, -inf
    %v1269 = vrot.slane %v1268, 4
    %v1270 = vmax.f32 %v1268, %v1269
    %v1271 = vrot.slane %v1270, 2
    %v1272 = vmax.f32 %v1270, %v1271
    %v1273 = vrot.slane %v1272, 1
    %v1274 = vmax.f32 %v1272, %v1273
    %vm1275 = vcmask 1047558
    %v1276 = vsel %vm1275, %v1221, -inf
    %vm1277 = vcmask 1040384
    %v1278 = vsel %vm1277, %v1222, -inf
    %v1279 = vmax.f32 %v1276, %v1278
    %v1280 = vrot.slane %v1279, 4
    %v1281 = vmax.f32 %v1279, %v1280
    %v1282 = vrot.slane %v1281, 2
    %v1283 = vmax.f32 %v1281, %v1282
    %v1284 = vrot.slane %v1283, 1
    %v1285 = vmax.f32 %v1283, %v1284
    %v1286 = vsel %vm1275, %v1239, -inf
    %v1287 = vsel %vm1277, %v1240, -inf
    %v1288 = vmax.f32 %v1286, %v1287
    %v1289 = vrot.slane %v1288, 4
    %v1290 = vmax.f32 %v1288, %v1289
    %v1291 = vrot.slane %v1290, 2
    %v1292 = vmax.f32 %v1290, %v1291
    %v1293 = vrot.slane %v1292, 1
    %v1294 = vmax.f32 %v1292, %v1293
    %vm1295 = vcmask 1043457
    %v1296 = vsel %vm1295, %v1222, -inf
    %v1297 = vrot.slane %v1296, 4
    %v1298 = vmax.f32 %v1296, %v1297
    %v1299 = vrot.slane %v1298, 2
    %v1300 = vmax.f32 %v1298, %v1299
    %v1301 = vrot.slane %v1300, 1
    %v1302 = vmax.f32 %v1300, %v1301
    %v1303 = vsel %vm1295, %v1240, -inf
    %v1304 = vrot.slane %v1303, 4
    %v1305 = vmax.f32 %v1303, %v1304
    %v1306 = vrot.slane %v1305, 2
    %v1307 = vmax.f32 %v1305, %v1306
    %v1308 = vrot.slane %v1307, 1
    %v1309 = vmax.f32 %v1307, %v1308
    %vm1310 = vcmask 1046532
    %v1311 = vsel %vm1310, %v1222, -inf
    %v1312 = vrot.slane %v1311, 4
    %v1313 = vmax.f32 %v1311, %v1312
    %v1314 = vrot.slane %v1313, 2
    %v1315 = vmax.f32 %v1313, %v1314
    %v1316 = vrot.slane %v1315, 1
    %v1317 = vmax.f32 %v1315, %v1316
    %v1318 = vsel %vm1310, %v1240, -inf
    %v1319 = vrot.slane %v1318, 4
    %v1320 = vmax.f32 %v1318, %v1319
    %v1321 = vrot.slane %v1320, 2
    %v1322 = vmax.f32 %v1320, %v1321
    %v1323 = vrot.slane %v1322, 1
    %v1324 = vmax.f32 %v1322, %v1323
    %vm1325 = vcmask 1047559
    %v1326 = vsel %vm1325, %v1222, -inf
    %vm1327 = vcmask 1041408
    %v1328 = vsel %vm1327, %v1223, -inf
    %v1329 = vmax.f32 %v1326, %v1328
    %v1330 = vrot.slane %v1329, 4
    %v1331 = vmax.f32 %v1329, %v1330
    %v1332 = vrot.slane %v1331, 2
    %v1333 = vmax.f32 %v1331, %v1332
    %v1334 = vrot.slane %v1333, 1
    %v1335 = vmax.f32 %v1333, %v1334
    %v1336 = vsel %vm1325, %v1240, -inf
    %v1337 = vsel %vm1327, %v1241, -inf
    %v1338 = vmax.f32 %v1336, %v1337
    %v1339 = vrot.slane %v1338, 4
    %v1340 = vmax.f32 %v1338, %v1339
    %v1341 = vrot.slane %v1340, 2
    %v1342 = vmax.f32 %v1340, %v1341
    %v1343 = vrot.slane %v1342, 1
    %v1344 = vmax.f32 %v1342, %v1343
    %vm1345 = vcmask 1044482
    %v1346 = vsel %vm1345, %v1223, -inf
    %v1347 = vrot.slane %v1346, 4
    %v1348 = vmax.f32 %v1346, %v1347
    %v1349 = vrot.slane %v1348, 2
    %v1350 = vmax.f32 %v1348, %v1349
    %v1351 = vrot.slane %v1350, 1
    %v1352 = vmax.f32 %v1350, %v1351
    %v1353 = vsel %vm1345, %v1241, -inf
    %v1354 = vrot.slane %v1353, 4
    %v1355 = vmax.f32 %v1353, %v1354
    %v1356 = vrot.slane %v1355, 2
    %v1357 = vmax.f32 %v1355, %v1356
    %v1358 = vrot.slane %v1357, 1
    %v1359 = vmax.f32 %v1357, %v1358
    %vm1360 = vcmask 1047557
    %v1361 = vsel %vm1360, %v1223, -inf
    %v1362 = vrot.slane %v1361, 4
    %v1363 = vmax.f32 %v1361, %v1362
    %v1364 = vrot.slane %v1363, 2
    %v1365 = vmax.f32 %v1363, %v1364
    %v1366 = vrot.slane %v1365, 1
    %v1367 = vmax.f32 %v1365, %v1366
    %v1368 = vsel %vm1360, %v1241, -inf
    %v1369 = vrot.slane %v1368, 4
    %v1370 = vmax.f32 %v1368, %v1369
    %v1371 = vrot.slane %v1370, 2
    %v1372 = vmax.f32 %v1370, %v1371
    %v1373 = vrot.slane %v1372, 1
    %v1374 = vmax.f32 %v1372, %v1373
    %v1375 = vsel %vm1245, %v1224, -inf
    %v1376 = vrot.slane %v1375, 4
    %v1377 = vmax.f32 %v1375, %v1376
    %v1378 = vrot.slane %v1377, 2
    %v1379 = vmax.f32 %v1377, %v1378
    %v1380 = vrot.slane %v1379, 1
    %v1381 = vmax.f32 %v1379, %v1380
    %v1382 = vsel %vm1245, %v1242, -inf
    %v1383 = vrot.slane %v1382, 4
    %v1384 = vmax.f32 %v1382, %v1383
    %v1385 = vrot.slane %v1384, 2
    %v1386 = vmax.f32 %v1384, %v1385
    %v1387 = vrot.slane %v1386, 1
    %v1388 = vmax.f32 %v1386, %v1387
    %v1389 = vsel %vm1260, %v1224, -inf
    %v1390 = vrot.slane %v1389, 4
    %v1391 = vmax.f32 %v1389, %v1390
    %v1392 = vrot.slane %v1391, 2
    %v1393 = vmax.f32 %v1391, %v1392
    %v1394 = vrot.slane %v1393, 1
    %v1395 = vmax.f32 %v1393, %v1394
    %v1396 = vsel %vm1260, %v1242, -inf
    %v1397 = vrot.slane %v1396, 4
    %v1398 = vmax.f32 %v1396, %v1397
    %v1399 = vrot.slane %v1398, 2
    %v1400 = vmax.f32 %v1398, %v1399
    %v1401 = vrot.slane %v1400, 1
    %v1402 = vmax.f32 %v1400, %v1401
    %v1403 = vsel %vm1275, %v1224, -inf
    %v1404 = vsel %vm1277, %v1225, -inf
    %v1405 = vmax.f32 %v1403, %v1404
    %v1406 = vrot.slane %v1405, 4
    %v1407 = vmax.f32 %v1405, %v1406
    %v1408 = vrot.slane %v1407, 2
    %v1409 = vmax.f32 %v1407, %v1408
    %v1410 = vrot.slane %v1409, 1
    %v1411 = vmax.f32 %v1409, %v1410
    %v1412 = vsel %vm1275, %v1242, -inf
    %v1413 = vsel %vm1277, %v1243, -inf
    %v1414 = vmax.f32 %v1412, %v1413
    %v1415 = vrot.slane %v1414, 4
    %v1416 = vmax.f32 %v1414, %v1415
    %v1417 = vrot.slane %v1416, 2
    %v1418 = vmax.f32 %v1416, %v1417
    %v1419 = vrot.slane %v1418, 1
    %v1420 = vmax.f32 %v1418, %v1419
    %v1421 = vsel %vm1295, %v1225, -inf
    %v1422 = vrot.slane %v1421, 4
    %v1423 = vmax.f32 %v1421, %v1422
    %v1424 = vrot.slane %v1423, 2
    %v1425 = vmax.f32 %v1423, %v1424
    %v1426 = vrot.slane %v1425, 1
    %v1427 = vmax.f32 %v1425, %v1426
    %v1428 = vsel %vm1295, %v1243, -inf
    %v1429 = vrot.slane %v1428, 4
    %v1430 = vmax.f32 %v1428, %v1429
    %v1431 = vrot.slane %v1430, 2
    %v1432 = vmax.f32 %v1430, %v1431
    %v1433 = vrot.slane %v1432, 1
    %v1434 = vmax.f32 %v1432, %v1433
    %v1435 = vsel %vm1310, %v1225, -inf
    %v1436 = vrot.slane %v1435, 4
    %v1437 = vmax.f32 %v1435, %v1436
    %v1438 = vrot.slane %v1437, 2
    %v1439 = vmax.f32 %v1437, %v1438
    %v1440 = vrot.slane %v1439, 1
    %v1441 = vmax.f32 %v1439, %v1440
    %v1442 = vsel %vm1310, %v1243, -inf
    %v1443 = vrot.slane %v1442, 4
    %v1444 = vmax.f32 %v1442, %v1443
    %v1445 = vrot.slane %v1444, 2
    %v1446 = vmax.f32 %v1444, %v1445
    %v1447 = vrot.slane %v1446, 1
    %v1448 = vmax.f32 %v1446, %v1447
    %v1449 = vsel %vm1325, %v1225, -inf
    %v1450 = vsel %vm1327, %v1226, -inf
    %v1451 = vmax.f32 %v1449, %v1450
    %v1452 = vrot.slane %v1451, 4
    %v1453 = vmax.f32 %v1451, %v1452
    %v1454 = vrot.slane %v1453, 2
    %v1455 = vmax.f32 %v1453, %v1454
    %v1456 = vrot.slane %v1455, 1
    %v1457 = vmax.f32 %v1455, %v1456
    %v1458 = vsel %vm1325, %v1243, -inf
    %v1459 = vsel %vm1327, %v1244, -inf
    %v1460 = vmax.f32 %v1458, %v1459
    %v1461 = vrot.slane %v1460, 4
    %v1462 = vmax.f32 %v1460, %v1461
    %v1463 = vrot.slane %v1462, 2
    %v1464 = vmax.f32 %v1462, %v1463
    %v1465 = vrot.slane %v1464, 1
    %v1466 = vmax.f32 %v1464, %v1465
    %v1467 = vsel %vm1345, %v1226, -inf
    %v1468 = vrot.slane %v1467, 4
    %v1469 = vmax.f32 %v1467, %v1468
    %v1470 = vrot.slane %v1469, 2
    %v1471 = vmax.f32 %v1469, %v1470
    %v1472 = vrot.slane %v1471, 1
    %v1473 = vmax.f32 %v1471, %v1472
    %v1474 = vsel %vm1345, %v1244, -inf
    %v1475 = vrot.slane %v1474, 4
    %v1476 = vmax.f32 %v1474, %v1475
    %v1477 = vrot.slane %v1476, 2
    %v1478 = vmax.f32 %v1476, %v1477
    %v1479 = vrot.slane %v1478, 1
    %v1480 = vmax.f32 %v1478, %v1479
    %v1481 = vsel %vm1360, %v1226, -inf
    %v1482 = vrot.slane %v1481, 4
    %v1483 = vmax.f32 %v1481, %v1482
    %v1484 = vrot.slane %v1483, 2
    %v1485 = vmax.f32 %v1483, %v1484
    %v1486 = vrot.slane %v1485, 1
    %v1487 = vmax.f32 %v1485, %v1486
    %v1488 = vsel %vm1360, %v1244, -inf
    %v1489 = vrot.slane %v1488, 4
    %v1490 = vmax.f32 %v1488, %v1489
    %v1491 = vrot.slane %v1490, 2
    %v1492 = vmax.f32 %v1490, %v1491
    %v1493 = vrot.slane %v1492, 1
    %v1494 = vmax.f32 %v1492, %v1493
    %v1495 = vsel %vm1277, %v1252, %v1267
    %v1496 = vsel %vm1277, %v1259, %v1274
    %v1497 = vsel %vm1327, %v1495, %v1285
    %v1498 = vsel %vm1327, %v1496, %v1294
    %v1499 = vsel %vm1245, %v1497, %v1302
    %v1500 = vsel %vm1245, %v1498, %v1309
    %vm1501 = vcmask 1043456
    %v1502 = vsel %vm1501, %v1499, %v1317
    %v1503 = vsel %vm1501, %v1500, %v1324
    %vm1504 = vcmask 1044480
    %v1505 = vsel %vm1504, %v1502, %v1335
    %v1506 = vsel %vm1504, %v1503, %v1344
    %v1507 = vsel %vm554, %v1505, %v1352
    %v1508 = vsel %vm554, %v1506, %v1359
    %vm1509 = vcmask 1046528
    %v1510 = vsel %vm1509, %v1507, %v1367
    %v1511 = vsel %vm1509, %v1508, %v1374
    %v1512 = vsel %vm1277, %v1381, %v1395
    %v1513 = vsel %vm1277, %v1388, %v1402
    %v1514 = vsel %vm1327, %v1512, %v1411
    %v1515 = vsel %vm1327, %v1513, %v1420
    %v1516 = vsel %vm1245, %v1514, %v1427
    %v1517 = vsel %vm1245, %v1515, %v1434
    %v1518 = vsel %vm1501, %v1516, %v1441
    %v1519 = vsel %vm1501, %v1517, %v1448
    %v1520 = vsel %vm1504, %v1518, %v1457
    %v1521 = vsel %vm1504, %v1519, %v1466
    %v1522 = vsel %vm554, %v1520, %v1473
    %v1523 = vsel %vm554, %v1521, %v1480
    %v1524 = vsel %vm1509, %v1522, %v1487
    %v1525 = vsel %vm1509, %v1523, %v1494
    %v1526 = vmax.f32 %v1510, 0.0
    %v1527 = vmax.f32 %v1511, 0.0
    %v1528 = vmax.f32 %v1524, 0.0
    %v1529 = vmax.f32 %v1525, 0.0
    %v1532 = vrot.slane %v1526, 1
    %v1533 = vrot.slane %v1527, 1
    %v1536 = vrot.slane %v1526, 2
    %v1537 = vrot.slane %v1527, 2
    %v1540 = vrot.slane %v1526, 3
    %v1541 = vrot.slane %v1527, 3
    %v1544 = vrot.slane %v1526, 4
    %v1545 = vrot.slane %v1527, 4
    %v1550 = vrot.slane %v1528, 1
    %v1551 = vrot.slane %v1529, 1
    %v1552 = vrot.slane %v1528, 2
    %v1553 = vrot.slane %v1529, 2
    %v1554 = vrot.slane %v1528, 3
    %v1555 = vrot.slane %v1529, 3
    %v1556 = vrot.slane %v1528, 4
    %v1557 = vrot.slane %v1529, 4
    %v1558 = vrot.slane %v1550, 4
    %v1559 = vrot.slane %v1551, 4
    %v1560 = vrot.slane %v1552, 4
    %v1561 = vrot.slane %v1553, 4
    %v1562 = vrot.slane %v1554, 4
    %v1563 = vrot.slane %v1555, 4
    %v1564 = vrot.slane %v1556, 4
    %v1565 = vrot.slane %v1557, 4
    %v1576 = vsel %vm1501, %v1526, %v1556
    %v1577 = vsel %vm1501, %v1527, %v1557
    %v1578 = vsel %vm1501, %v1532, %v1558
    %v1579 = vsel %vm1501, %v1533, %v1559
    %v1580 = vsel %vm1501, %v1536, %v1560
    %v1581 = vsel %vm1501, %v1537, %v1561
    %v1582 = vsel %vm1501, %v1540, %v1562
    %v1583 = vsel %vm1501, %v1541, %v1563
    %v1584 = vsel %vm1501, %v1544, %v1564
    %v1585 = vsel %vm1501, %v1545, %v1565
    %v1586 = vpack.c.bf16 %v1576, %v1576
    %v1587 = vpack.c.bf16 %v1577, %v1577
    %v1588 = vpack.c.bf16 %v1578, %v1578
    %v1589 = vpack.c.bf16 %v1579, %v1579
    %v1590 = vpack.c.bf16 %v1580, %v1580
    %v1591 = vpack.c.bf16 %v1581, %v1581
    %v1592 = vpack.c.bf16 %v1582, %v1582
    %v1593 = vpack.c.bf16 %v1583, %v1583
    %v1594 = vpack.c.bf16 %v1584, %v1584
    %v1595 = vpack.c.bf16 %v1585, %v1585
    %v1596 = vld [vmem:[%s3] sm:$0xff]
    %v1597 = vld [vmem:[%s3 + $0x8] sm:$0xff]
    %v1598 = vld [vmem:[%s3 + $0x10] sm:$0xff]
    %v1599 = vld [vmem:[%s3 + $0x18] sm:$0xff]
    %v1600 = vld [vmem:[%s3 + $0x20] sm:$0xff]
    %v1601 = vld [vmem:[%s3 + $0x28] sm:$0xff]
    %v1602 = vld [vmem:[%s3 + $0x30] sm:$0xff]
    %v1603 = vld [vmem:[%s3 + $0x38] sm:$0xff]
    %v1604 = vld [vmem:[%s3 + $0x40] sm:$0xff]
    %v1605 = vld [vmem:[%s3 + $0x48] sm:$0xff]
    %v1606 = vld [vmem:[%s3 + $0x50] sm:$0xff]
    %v1607 = vld [vmem:[%s3 + $0x58] sm:$0xff]
    %v1608 = vld [vmem:[%s3 + $0x60] sm:$0xff]
    %v1609 = vld [vmem:[%s3 + $0x68] sm:$0xff]
    %v1610 = vld [vmem:[%s3 + $0x70] sm:$0xff]
    %v1611 = vld [vmem:[%s3 + $0x78] sm:$0xff]
    %v1612 = vld [vmem:[%s3 + $0x80] sm:$0xff]
    %v1613 = vld [vmem:[%s3 + $0x88] sm:$0xff]
    %v1614 = vld [vmem:[%s3 + $0x90] sm:$0xff]
    %v1615 = vld [vmem:[%s3 + $0x98] sm:$0xff]
    %v1616 = vld [vmem:[%s3 + $0xa0] sm:$0xff]
    %v1617 = vld [vmem:[%s3 + $0xa8] sm:$0xff]
    %v1618 = vld [vmem:[%s3 + $0xb0] sm:$0xff]
    %v1619 = vld [vmem:[%s3 + $0xb8] sm:$0xff]
    %v1620 = vld [vmem:[%s3 + $0xc0] sm:$0xff]
    %v1621 = vld [vmem:[%s3 + $0xc8] sm:$0xff]
    %v1622 = vld [vmem:[%s3 + $0xd0] sm:$0xff]
    %v1623 = vld [vmem:[%s3 + $0xd8] sm:$0xff]
    %v1624 = vld [vmem:[%s3 + $0xe0] sm:$0xff]
    %v1625 = vld [vmem:[%s3 + $0xe8] sm:$0xff]
    %v1626 = vld [vmem:[%s3 + $0xf0] sm:$0xff]
    %v1627 = vld [vmem:[%s3 + $0xf8] sm:$0xff]
    %v1628 = vld [vmem:[%s3 + $0x100] sm:$0xff]
    %v1629 = vld [vmem:[%s3 + $0x108] sm:$0xff]
    %v1630 = vld [vmem:[%s3 + $0x110] sm:$0xff]
    %v1631 = vld [vmem:[%s3 + $0x118] sm:$0xff]
    %v1632 = vld [vmem:[%s3 + $0x120] sm:$0xff]
    %v1633 = vld [vmem:[%s3 + $0x128] sm:$0xff]
    %v1634 = vld [vmem:[%s3 + $0x130] sm:$0xff]
    %v1635 = vld [vmem:[%s3 + $0x138] sm:$0xff]
    %v1636 = vld [vmem:[%s3 + $0x140] sm:$0xff]
    %v1637 = vld [vmem:[%s3 + $0x148] sm:$0xff]
    %v1638 = vld [vmem:[%s3 + $0x150] sm:$0xff]
    %v1639 = vld [vmem:[%s3 + $0x158] sm:$0xff]
    %v1640 = vld [vmem:[%s3 + $0x160] sm:$0xff]
    %v1641 = vld [vmem:[%s3 + $0x168] sm:$0xff]
    %v1642 = vld [vmem:[%s3 + $0x170] sm:$0xff]
    %v1643 = vld [vmem:[%s3 + $0x178] sm:$0xff]
    %v1644 = vld [vmem:[%s3 + $0x180] sm:$0xff]
    %v1645 = vld [vmem:[%s3 + $0x188] sm:$0xff]
    %v1646 = vld [vmem:[%s3 + $0x190] sm:$0xff]
    %v1647 = vld [vmem:[%s3 + $0x198] sm:$0xff]
    %v1648 = vld [vmem:[%s3 + $0x1a0] sm:$0xff]
    %v1649 = vld [vmem:[%s3 + $0x1a8] sm:$0xff]
    %v1650 = vld [vmem:[%s3 + $0x1b0] sm:$0xff]
    %v1651 = vld [vmem:[%s3 + $0x1b8] sm:$0xff]
    %v1652 = vld [vmem:[%s3 + $0x1c0] sm:$0xff]
    %v1653 = vld [vmem:[%s3 + $0x1c8] sm:$0xff]
    %v1654 = vld [vmem:[%s3 + $0x1d0] sm:$0xff]
    %v1655 = vld [vmem:[%s3 + $0x1d8] sm:$0xff]
    %v1656 = vld [vmem:[%s3 + $0x1e0] sm:$0xff]
    %v1657 = vld [vmem:[%s3 + $0x1e8] sm:$0xff]
    %v1658 = vld [vmem:[%s3 + $0x1f0] sm:$0xff]
    %v1659 = vld [vmem:[%s3 + $0x1f8] sm:$0xff]
    %v1660 = vld [vmem:[%s3 + $0x200] sm:$0xff]
    %v1661 = vld [vmem:[%s3 + $0x208] sm:$0xff]
    %v1662 = vld [vmem:[%s3 + $0x210] sm:$0xff]
    %v1663 = vld [vmem:[%s3 + $0x218] sm:$0xff]
    %v1664 = vld [vmem:[%s3 + $0x220] sm:$0xff]
    %v1665 = vld [vmem:[%s3 + $0x228] sm:$0xff]
    %v1666 = vld [vmem:[%s3 + $0x230] sm:$0xff]
    %v1667 = vld [vmem:[%s3 + $0x238] sm:$0xff]
    %v1668 = vld [vmem:[%s3 + $0x240] sm:$0xff]
    %v1669 = vld [vmem:[%s3 + $0x248] sm:$0xff]
    %v1670 = vld [vmem:[%s3 + $0x250] sm:$0xff]
    %v1671 = vld [vmem:[%s3 + $0x258] sm:$0xff]
    %v1672 = vld [vmem:[%s3 + $0x260] sm:$0xff]
    %v1673 = vld [vmem:[%s3 + $0x268] sm:$0xff]
    %v1674 = vld [vmem:[%s3 + $0x270] sm:$0xff]
    %v1675 = vld [vmem:[%s3 + $0x278] sm:$0xff]
    %v1676 = vld [vmem:[%s3 + $0x280] sm:$0xff]
    %v1677 = vld [vmem:[%s3 + $0x288] sm:$0xff]
    %v1678 = vld [vmem:[%s3 + $0x290] sm:$0xff]
    %v1679 = vld [vmem:[%s3 + $0x298] sm:$0xff]
    %v1680 = vld [vmem:[%s3 + $0x2a0] sm:$0xff]
    %v1681 = vld [vmem:[%s3 + $0x2a8] sm:$0xff]
    %v1682 = vld [vmem:[%s3 + $0x2b0] sm:$0xff]
    %v1683 = vld [vmem:[%s3 + $0x2b8] sm:$0xff]
    %v1684 = vld [vmem:[%s3 + $0x2c0] sm:$0xff]
    %v1685 = vld [vmem:[%s3 + $0x2c8] sm:$0xff]
    %v1686 = vld [vmem:[%s3 + $0x2d0] sm:$0xff]
    %v1687 = vld [vmem:[%s3 + $0x2d8] sm:$0xff]
    %v1688 = vld [vmem:[%s3 + $0x2e0] sm:$0xff]
    %v1689 = vld [vmem:[%s3 + $0x2e8] sm:$0xff]
    %v1690 = vld [vmem:[%s3 + $0x2f0] sm:$0xff]
    %v1691 = vld [vmem:[%s3 + $0x2f8] sm:$0xff]
    %v1692 = vld [vmem:[%s3 + $0x300] sm:$0xff]
    %v1693 = vld [vmem:[%s3 + $0x308] sm:$0xff]
    %v1694 = vld [vmem:[%s3 + $0x310] sm:$0xff]
    %v1695 = vld [vmem:[%s3 + $0x318] sm:$0xff]
    %v1696 = vld [vmem:[%s3 + $0x320] sm:$0xff]
    %v1697 = vld [vmem:[%s3 + $0x328] sm:$0xff]
    %v1698 = vld [vmem:[%s3 + $0x330] sm:$0xff]
    %v1699 = vld [vmem:[%s3 + $0x338] sm:$0xff]
    %v1700 = vld [vmem:[%s3 + $0x340] sm:$0xff]
    %v1701 = vld [vmem:[%s3 + $0x348] sm:$0xff]
    %v1702 = vld [vmem:[%s3 + $0x350] sm:$0xff]
    %v1703 = vld [vmem:[%s3 + $0x358] sm:$0xff]
    %v1704 = vld [vmem:[%s3 + $0x360] sm:$0xff]
    %v1705 = vld [vmem:[%s3 + $0x368] sm:$0xff]
    %v1706 = vld [vmem:[%s3 + $0x370] sm:$0xff]
    %v1707 = vld [vmem:[%s3 + $0x378] sm:$0xff]
    %v1708 = vld [vmem:[%s3 + $0x380] sm:$0xff]
    %v1709 = vld [vmem:[%s3 + $0x388] sm:$0xff]
    %v1710 = vld [vmem:[%s3 + $0x390] sm:$0xff]
    %v1711 = vld [vmem:[%s3 + $0x398] sm:$0xff]
    %v1712 = vld [vmem:[%s3 + $0x3a0] sm:$0xff]
    %v1713 = vld [vmem:[%s3 + $0x3a8] sm:$0xff]
    %v1714 = vld [vmem:[%s3 + $0x3b0] sm:$0xff]
    %v1715 = vld [vmem:[%s3 + $0x3b8] sm:$0xff]
    %v1716 = vld [vmem:[%s3 + $0x3c0] sm:$0xff]
    %v1717 = vld [vmem:[%s3 + $0x3c8] sm:$0xff]
    %v1718 = vld [vmem:[%s3 + $0x3d0] sm:$0xff]
    %v1719 = vld [vmem:[%s3 + $0x3d8] sm:$0xff]
    %v1720 = vld [vmem:[%s3 + $0x3e0] sm:$0xff]
    %v1721 = vld [vmem:[%s3 + $0x3e8] sm:$0xff]
    %v1722 = vld [vmem:[%s3 + $0x3f0] sm:$0xff]
    %v1723 = vld [vmem:[%s3 + $0x3f8] sm:$0xff]
    %v1724 = vld [vmem:[%s3 + $0x400] sm:$0xff]
    %v1725 = vld [vmem:[%s3 + $0x408] sm:$0xff]
    %v1726 = vld [vmem:[%s3 + $0x410] sm:$0xff]
    %v1727 = vld [vmem:[%s3 + $0x418] sm:$0xff]
    %v1728 = vld [vmem:[%s3 + $0x420] sm:$0xff]
    %v1729 = vld [vmem:[%s3 + $0x428] sm:$0xff]
    %v1730 = vld [vmem:[%s3 + $0x430] sm:$0xff]
    %v1731 = vld [vmem:[%s3 + $0x438] sm:$0xff]
    %v1732 = vld [vmem:[%s3 + $0x440] sm:$0xff]
    %v1733 = vld [vmem:[%s3 + $0x448] sm:$0xff]
    %v1734 = vld [vmem:[%s3 + $0x450] sm:$0xff]
    %v1735 = vld [vmem:[%s3 + $0x458] sm:$0xff]
    %v1736 = vld [vmem:[%s3 + $0x460] sm:$0xff]
    %v1737 = vld [vmem:[%s3 + $0x468] sm:$0xff]
    %v1738 = vld [vmem:[%s3 + $0x470] sm:$0xff]
    %v1739 = vld [vmem:[%s3 + $0x478] sm:$0xff]
    %v1740 = vld [vmem:[%s3 + $0x480] sm:$0xff]
    %v1741 = vld [vmem:[%s3 + $0x488] sm:$0xff]
    %v1742 = vld [vmem:[%s3 + $0x490] sm:$0xff]
    %v1743 = vld [vmem:[%s3 + $0x498] sm:$0xff]
    %v1744 = vld [vmem:[%s3 + $0x4a0] sm:$0xff]
    %v1745 = vld [vmem:[%s3 + $0x4a8] sm:$0xff]
    %v1746 = vld [vmem:[%s3 + $0x4b0] sm:$0xff]
    %v1747 = vld [vmem:[%s3 + $0x4b8] sm:$0xff]
    %v1748 = vld [vmem:[%s3 + $0x4c0] sm:$0xff]
    %v1749 = vld [vmem:[%s3 + $0x4c8] sm:$0xff]
    %v1750 = vld [vmem:[%s3 + $0x4d0] sm:$0xff]
    %v1751 = vld [vmem:[%s3 + $0x4d8] sm:$0xff]
    %v1752 = vld [vmem:[%s3 + $0x4e0] sm:$0xff]
    %v1753 = vld [vmem:[%s3 + $0x4e8] sm:$0xff]
    %v1754 = vld [vmem:[%s3 + $0x4f0] sm:$0xff]
    %v1755 = vld [vmem:[%s3 + $0x4f8] sm:$0xff]
    %v1756 = vld [vmem:[%s4] sm:$0x3]
    %v1758 = vlaneseq
    %v1759 = vshrl.u32 %v1758, 7
    %v1760 = vsub.s32 0, %v1759
    %v1761 = vrot.slane %v1756, %v1760
    %v1762 = vlaneseq
    %v1763 = vshrl.u32 %v1762, 7
    %v1764 = vsub.s32 1, %v1763
    %v1765 = vrot.slane %v1756, %v1764
    %v1928 = vunpack.c.l.b16 %v1596
    %v1929 = vunpack.c.h.b16 %v1596
    %v1930 = vunpack.c.l.b16 %v1597
    %v1931 = vunpack.c.h.b16 %v1597
    %v1932 = vunpack.c.l.b16 %v1598
    %v1933 = vunpack.c.h.b16 %v1598
    %v1934 = vunpack.c.l.b16 %v1599
    %v1935 = vunpack.c.h.b16 %v1599
    %v1936 = vunpack.c.l.b16 %v1600
    %v1937 = vunpack.c.h.b16 %v1600
    %v1938 = vunpack.c.l.b16 %v1601
    %v1939 = vunpack.c.h.b16 %v1601
    %v1940 = vunpack.c.l.b16 %v1602
    %v1941 = vunpack.c.h.b16 %v1602
    %v1942 = vunpack.c.l.b16 %v1603
    %v1943 = vunpack.c.h.b16 %v1603
    %v1944 = vunpack.c.l.b16 %v1604
    %v1945 = vunpack.c.h.b16 %v1604
    %v1946 = vunpack.c.l.b16 %v1605
    %v1947 = vunpack.c.h.b16 %v1605
    %v1948 = vunpack.c.l.b16 %v1606
    %v1949 = vunpack.c.h.b16 %v1606
    %v1950 = vunpack.c.l.b16 %v1607
    %v1951 = vunpack.c.h.b16 %v1607
    %v1952 = vunpack.c.l.b16 %v1608
    %v1953 = vunpack.c.h.b16 %v1608
    %v1954 = vunpack.c.l.b16 %v1609
    %v1955 = vunpack.c.h.b16 %v1609
    %v1956 = vunpack.c.l.b16 %v1610
    %v1957 = vunpack.c.h.b16 %v1610
    %v1958 = vunpack.c.l.b16 %v1611
    %v1959 = vunpack.c.h.b16 %v1611
    %v1960 = vunpack.c.l.b16 %v1612
    %v1961 = vunpack.c.h.b16 %v1612
    %v1962 = vunpack.c.l.b16 %v1613
    %v1963 = vunpack.c.h.b16 %v1613
    %v1964 = vunpack.c.l.b16 %v1614
    %v1965 = vunpack.c.h.b16 %v1614
    %v1966 = vunpack.c.l.b16 %v1615
    %v1967 = vunpack.c.h.b16 %v1615
    %v1968 = vunpack.c.l.b16 %v1616
    %v1969 = vunpack.c.h.b16 %v1616
    %v1970 = vunpack.c.l.b16 %v1617
    %v1971 = vunpack.c.h.b16 %v1617
    %v1972 = vunpack.c.l.b16 %v1618
    %v1973 = vunpack.c.h.b16 %v1618
    %v1974 = vunpack.c.l.b16 %v1619
    %v1975 = vunpack.c.h.b16 %v1619
    %v1976 = vunpack.c.l.b16 %v1620
    %v1977 = vunpack.c.h.b16 %v1620
    %v1978 = vunpack.c.l.b16 %v1621
    %v1979 = vunpack.c.h.b16 %v1621
    %v1980 = vunpack.c.l.b16 %v1622
    %v1981 = vunpack.c.h.b16 %v1622
    %v1982 = vunpack.c.l.b16 %v1623
    %v1983 = vunpack.c.h.b16 %v1623
    %v1984 = vunpack.c.l.b16 %v1624
    %v1985 = vunpack.c.h.b16 %v1624
    %v1986 = vunpack.c.l.b16 %v1625
    %v1987 = vunpack.c.h.b16 %v1625
    %v1988 = vunpack.c.l.b16 %v1626
    %v1989 = vunpack.c.h.b16 %v1626
    %v1990 = vunpack.c.l.b16 %v1627
    %v1991 = vunpack.c.h.b16 %v1627
    %v1992 = vunpack.c.l.b16 %v1628
    %v1993 = vunpack.c.h.b16 %v1628
    %v1994 = vunpack.c.l.b16 %v1629
    %v1995 = vunpack.c.h.b16 %v1629
    %v1996 = vunpack.c.l.b16 %v1630
    %v1997 = vunpack.c.h.b16 %v1630
    %v1998 = vunpack.c.l.b16 %v1631
    %v1999 = vunpack.c.h.b16 %v1631
    %v2000 = vunpack.c.l.b16 %v1632
    %v2001 = vunpack.c.h.b16 %v1632
    %v2002 = vunpack.c.l.b16 %v1633
    %v2003 = vunpack.c.h.b16 %v1633
    %v2004 = vunpack.c.l.b16 %v1634
    %v2005 = vunpack.c.h.b16 %v1634
    %v2006 = vunpack.c.l.b16 %v1635
    %v2007 = vunpack.c.h.b16 %v1635
    %v2008 = vunpack.c.l.b16 %v1636
    %v2009 = vunpack.c.h.b16 %v1636
    %v2010 = vunpack.c.l.b16 %v1637
    %v2011 = vunpack.c.h.b16 %v1637
    %v2012 = vunpack.c.l.b16 %v1638
    %v2013 = vunpack.c.h.b16 %v1638
    %v2014 = vunpack.c.l.b16 %v1639
    %v2015 = vunpack.c.h.b16 %v1639
    %v2016 = vunpack.c.l.b16 %v1640
    %v2017 = vunpack.c.h.b16 %v1640
    %v2018 = vunpack.c.l.b16 %v1641
    %v2019 = vunpack.c.h.b16 %v1641
    %v2020 = vunpack.c.l.b16 %v1642
    %v2021 = vunpack.c.h.b16 %v1642
    %v2022 = vunpack.c.l.b16 %v1643
    %v2023 = vunpack.c.h.b16 %v1643
    %v2024 = vunpack.c.l.b16 %v1644
    %v2025 = vunpack.c.h.b16 %v1644
    %v2026 = vunpack.c.l.b16 %v1645
    %v2027 = vunpack.c.h.b16 %v1645
    %v2028 = vunpack.c.l.b16 %v1646
    %v2029 = vunpack.c.h.b16 %v1646
    %v2030 = vunpack.c.l.b16 %v1647
    %v2031 = vunpack.c.h.b16 %v1647
    %v2032 = vunpack.c.l.b16 %v1648
    %v2033 = vunpack.c.h.b16 %v1648
    %v2034 = vunpack.c.l.b16 %v1649
    %v2035 = vunpack.c.h.b16 %v1649
    %v2036 = vunpack.c.l.b16 %v1650
    %v2037 = vunpack.c.h.b16 %v1650
    %v2038 = vunpack.c.l.b16 %v1651
    %v2039 = vunpack.c.h.b16 %v1651
    %v2040 = vunpack.c.l.b16 %v1652
    %v2041 = vunpack.c.h.b16 %v1652
    %v2042 = vunpack.c.l.b16 %v1653
    %v2043 = vunpack.c.h.b16 %v1653
    %v2044 = vunpack.c.l.b16 %v1654
    %v2045 = vunpack.c.h.b16 %v1654
    %v2046 = vunpack.c.l.b16 %v1655
    %v2047 = vunpack.c.h.b16 %v1655
    %v2048 = vunpack.c.l.b16 %v1656
    %v2049 = vunpack.c.h.b16 %v1656
    %v2050 = vunpack.c.l.b16 %v1657
    %v2051 = vunpack.c.h.b16 %v1657
    %v2052 = vunpack.c.l.b16 %v1658
    %v2053 = vunpack.c.h.b16 %v1658
    %v2054 = vunpack.c.l.b16 %v1659
    %v2055 = vunpack.c.h.b16 %v1659
    %v2056 = vunpack.c.l.b16 %v1660
    %v2057 = vunpack.c.h.b16 %v1660
    %v2058 = vunpack.c.l.b16 %v1661
    %v2059 = vunpack.c.h.b16 %v1661
    %v2060 = vunpack.c.l.b16 %v1662
    %v2061 = vunpack.c.h.b16 %v1662
    %v2062 = vunpack.c.l.b16 %v1663
    %v2063 = vunpack.c.h.b16 %v1663
    %v2064 = vunpack.c.l.b16 %v1664
    %v2065 = vunpack.c.h.b16 %v1664
    %v2066 = vunpack.c.l.b16 %v1665
    %v2067 = vunpack.c.h.b16 %v1665
    %v2068 = vunpack.c.l.b16 %v1666
    %v2069 = vunpack.c.h.b16 %v1666
    %v2070 = vunpack.c.l.b16 %v1667
    %v2071 = vunpack.c.h.b16 %v1667
    %v2072 = vunpack.c.l.b16 %v1668
    %v2073 = vunpack.c.h.b16 %v1668
    %v2074 = vunpack.c.l.b16 %v1669
    %v2075 = vunpack.c.h.b16 %v1669
    %v2076 = vunpack.c.l.b16 %v1670
    %v2077 = vunpack.c.h.b16 %v1670
    %v2078 = vunpack.c.l.b16 %v1671
    %v2079 = vunpack.c.h.b16 %v1671
    %v2080 = vunpack.c.l.b16 %v1672
    %v2081 = vunpack.c.h.b16 %v1672
    %v2082 = vunpack.c.l.b16 %v1673
    %v2083 = vunpack.c.h.b16 %v1673
    %v2084 = vunpack.c.l.b16 %v1674
    %v2085 = vunpack.c.h.b16 %v1674
    %v2086 = vunpack.c.l.b16 %v1675
    %v2087 = vunpack.c.h.b16 %v1675
    %v2088 = vunpack.c.l.b16 %v1676
    %v2089 = vunpack.c.h.b16 %v1676
    %v2090 = vunpack.c.l.b16 %v1677
    %v2091 = vunpack.c.h.b16 %v1677
    %v2092 = vunpack.c.l.b16 %v1678
    %v2093 = vunpack.c.h.b16 %v1678
    %v2094 = vunpack.c.l.b16 %v1679
    %v2095 = vunpack.c.h.b16 %v1679
    %v2096 = vunpack.c.l.b16 %v1680
    %v2097 = vunpack.c.h.b16 %v1680
    %v2098 = vunpack.c.l.b16 %v1681
    %v2099 = vunpack.c.h.b16 %v1681
    %v2100 = vunpack.c.l.b16 %v1682
    %v2101 = vunpack.c.h.b16 %v1682
    %v2102 = vunpack.c.l.b16 %v1683
    %v2103 = vunpack.c.h.b16 %v1683
    %v2104 = vunpack.c.l.b16 %v1684
    %v2105 = vunpack.c.h.b16 %v1684
    %v2106 = vunpack.c.l.b16 %v1685
    %v2107 = vunpack.c.h.b16 %v1685
    %v2108 = vunpack.c.l.b16 %v1686
    %v2109 = vunpack.c.h.b16 %v1686
    %v2110 = vunpack.c.l.b16 %v1687
    %v2111 = vunpack.c.h.b16 %v1687
    %v2112 = vunpack.c.l.b16 %v1688
    %v2113 = vunpack.c.h.b16 %v1688
    %v2114 = vunpack.c.l.b16 %v1689
    %v2115 = vunpack.c.h.b16 %v1689
    %v2116 = vunpack.c.l.b16 %v1690
    %v2117 = vunpack.c.h.b16 %v1690
    %v2118 = vunpack.c.l.b16 %v1691
    %v2119 = vunpack.c.h.b16 %v1691
    %v2120 = vunpack.c.l.b16 %v1692
    %v2121 = vunpack.c.h.b16 %v1692
    %v2122 = vunpack.c.l.b16 %v1693
    %v2123 = vunpack.c.h.b16 %v1693
    %v2124 = vunpack.c.l.b16 %v1694
    %v2125 = vunpack.c.h.b16 %v1694
    %v2126 = vunpack.c.l.b16 %v1695
    %v2127 = vunpack.c.h.b16 %v1695
    %v2128 = vunpack.c.l.b16 %v1696
    %v2129 = vunpack.c.h.b16 %v1696
    %v2130 = vunpack.c.l.b16 %v1697
    %v2131 = vunpack.c.h.b16 %v1697
    %v2132 = vunpack.c.l.b16 %v1698
    %v2133 = vunpack.c.h.b16 %v1698
    %v2134 = vunpack.c.l.b16 %v1699
    %v2135 = vunpack.c.h.b16 %v1699
    %v2136 = vunpack.c.l.b16 %v1700
    %v2137 = vunpack.c.h.b16 %v1700
    %v2138 = vunpack.c.l.b16 %v1701
    %v2139 = vunpack.c.h.b16 %v1701
    %v2140 = vunpack.c.l.b16 %v1702
    %v2141 = vunpack.c.h.b16 %v1702
    %v2142 = vunpack.c.l.b16 %v1703
    %v2143 = vunpack.c.h.b16 %v1703
    %v2144 = vunpack.c.l.b16 %v1704
    %v2145 = vunpack.c.h.b16 %v1704
    %v2146 = vunpack.c.l.b16 %v1705
    %v2147 = vunpack.c.h.b16 %v1705
    %v2148 = vunpack.c.l.b16 %v1706
    %v2149 = vunpack.c.h.b16 %v1706
    %v2150 = vunpack.c.l.b16 %v1707
    %v2151 = vunpack.c.h.b16 %v1707
    %v2152 = vunpack.c.l.b16 %v1708
    %v2153 = vunpack.c.h.b16 %v1708
    %v2154 = vunpack.c.l.b16 %v1709
    %v2155 = vunpack.c.h.b16 %v1709
    %v2156 = vunpack.c.l.b16 %v1710
    %v2157 = vunpack.c.h.b16 %v1710
    %v2158 = vunpack.c.l.b16 %v1711
    %v2159 = vunpack.c.h.b16 %v1711
    %v2160 = vunpack.c.l.b16 %v1712
    %v2161 = vunpack.c.h.b16 %v1712
    %v2162 = vunpack.c.l.b16 %v1713
    %v2163 = vunpack.c.h.b16 %v1713
    %v2164 = vunpack.c.l.b16 %v1714
    %v2165 = vunpack.c.h.b16 %v1714
    %v2166 = vunpack.c.l.b16 %v1715
    %v2167 = vunpack.c.h.b16 %v1715
    %v2168 = vunpack.c.l.b16 %v1716
    %v2169 = vunpack.c.h.b16 %v1716
    %v2170 = vunpack.c.l.b16 %v1717
    %v2171 = vunpack.c.h.b16 %v1717
    %v2172 = vunpack.c.l.b16 %v1718
    %v2173 = vunpack.c.h.b16 %v1718
    %v2174 = vunpack.c.l.b16 %v1719
    %v2175 = vunpack.c.h.b16 %v1719
    %v2176 = vunpack.c.l.b16 %v1720
    %v2177 = vunpack.c.h.b16 %v1720
    %v2178 = vunpack.c.l.b16 %v1721
    %v2179 = vunpack.c.h.b16 %v1721
    %v2180 = vunpack.c.l.b16 %v1722
    %v2181 = vunpack.c.h.b16 %v1722
    %v2182 = vunpack.c.l.b16 %v1723
    %v2183 = vunpack.c.h.b16 %v1723
    %v2184 = vunpack.c.l.b16 %v1724
    %v2185 = vunpack.c.h.b16 %v1724
    %v2186 = vunpack.c.l.b16 %v1725
    %v2187 = vunpack.c.h.b16 %v1725
    %v2188 = vunpack.c.l.b16 %v1726
    %v2189 = vunpack.c.h.b16 %v1726
    %v2190 = vunpack.c.l.b16 %v1727
    %v2191 = vunpack.c.h.b16 %v1727
    %v2192 = vunpack.c.l.b16 %v1728
    %v2193 = vunpack.c.h.b16 %v1728
    %v2194 = vunpack.c.l.b16 %v1729
    %v2195 = vunpack.c.h.b16 %v1729
    %v2196 = vunpack.c.l.b16 %v1730
    %v2197 = vunpack.c.h.b16 %v1730
    %v2198 = vunpack.c.l.b16 %v1731
    %v2199 = vunpack.c.h.b16 %v1731
    %v2200 = vunpack.c.l.b16 %v1732
    %v2201 = vunpack.c.h.b16 %v1732
    %v2202 = vunpack.c.l.b16 %v1733
    %v2203 = vunpack.c.h.b16 %v1733
    %v2204 = vunpack.c.l.b16 %v1734
    %v2205 = vunpack.c.h.b16 %v1734
    %v2206 = vunpack.c.l.b16 %v1735
    %v2207 = vunpack.c.h.b16 %v1735
    %v2208 = vunpack.c.l.b16 %v1736
    %v2209 = vunpack.c.h.b16 %v1736
    %v2210 = vunpack.c.l.b16 %v1737
    %v2211 = vunpack.c.h.b16 %v1737
    %v2212 = vunpack.c.l.b16 %v1738
    %v2213 = vunpack.c.h.b16 %v1738
    %v2214 = vunpack.c.l.b16 %v1739
    %v2215 = vunpack.c.h.b16 %v1739
    %v2216 = vunpack.c.l.b16 %v1740
    %v2217 = vunpack.c.h.b16 %v1740
    %v2218 = vunpack.c.l.b16 %v1741
    %v2219 = vunpack.c.h.b16 %v1741
    %v2220 = vunpack.c.l.b16 %v1742
    %v2221 = vunpack.c.h.b16 %v1742
    %v2222 = vunpack.c.l.b16 %v1743
    %v2223 = vunpack.c.h.b16 %v1743
    %v2224 = vunpack.c.l.b16 %v1744
    %v2225 = vunpack.c.h.b16 %v1744
    %v2226 = vunpack.c.l.b16 %v1745
    %v2227 = vunpack.c.h.b16 %v1745
    %v2228 = vunpack.c.l.b16 %v1746
    %v2229 = vunpack.c.h.b16 %v1746
    %v2230 = vunpack.c.l.b16 %v1747
    %v2231 = vunpack.c.h.b16 %v1747
    %v2232 = vunpack.c.l.b16 %v1748
    %v2233 = vunpack.c.h.b16 %v1748
    %v2234 = vunpack.c.l.b16 %v1749
    %v2235 = vunpack.c.h.b16 %v1749
    %v2236 = vunpack.c.l.b16 %v1750
    %v2237 = vunpack.c.h.b16 %v1750
    %v2238 = vunpack.c.l.b16 %v1751
    %v2239 = vunpack.c.h.b16 %v1751
    %v2240 = vunpack.c.l.b16 %v1752
    %v2241 = vunpack.c.h.b16 %v1752
    %v2242 = vunpack.c.l.b16 %v1753
    %v2243 = vunpack.c.h.b16 %v1753
    %v2244 = vunpack.c.l.b16 %v1754
    %v2245 = vunpack.c.h.b16 %v1754
    %v2246 = vunpack.c.l.b16 %v1755
    %v2247 = vunpack.c.h.b16 %v1755
    %v2248 = vpack.c.b16 %v1930, %v1928
    %v2249 = vpack.c.b16 %v1931, %v1929
    %v2250 = vpack.c.b16 %v1934, %v1932
    %v2251 = vpack.c.b16 %v1935, %v1933
    %v2252 = vpack.c.b16 %v1938, %v1936
    %v2253 = vpack.c.b16 %v1939, %v1937
    %v2254 = vpack.c.b16 %v1942, %v1940
    %v2255 = vpack.c.b16 %v1943, %v1941
    %v2256 = vpack.c.b16 %v1946, %v1944
    %v2257 = vpack.c.b16 %v1947, %v1945
    %v2258 = vpack.c.b16 %v1950, %v1948
    %v2259 = vpack.c.b16 %v1951, %v1949
    %v2260 = vpack.c.b16 %v1954, %v1952
    %v2261 = vpack.c.b16 %v1955, %v1953
    %v2262 = vpack.c.b16 %v1958, %v1956
    %v2263 = vpack.c.b16 %v1959, %v1957
    %v2264 = vpack.c.b16 %v1962, %v1960
    %v2265 = vpack.c.b16 %v1963, %v1961
    %v2266 = vpack.c.b16 %v1966, %v1964
    %v2267 = vpack.c.b16 %v1967, %v1965
    %v2268 = vpack.c.b16 %v1970, %v1968
    %v2269 = vpack.c.b16 %v1971, %v1969
    %v2270 = vpack.c.b16 %v1974, %v1972
    %v2271 = vpack.c.b16 %v1975, %v1973
    %v2272 = vpack.c.b16 %v1978, %v1976
    %v2273 = vpack.c.b16 %v1979, %v1977
    %v2274 = vpack.c.b16 %v1982, %v1980
    %v2275 = vpack.c.b16 %v1983, %v1981
    %v2276 = vpack.c.b16 %v1986, %v1984
    %v2277 = vpack.c.b16 %v1987, %v1985
    %v2278 = vpack.c.b16 %v1990, %v1988
    %v2279 = vpack.c.b16 %v1991, %v1989
    %v2280 = vpack.c.b16 %v1994, %v1992
    %v2281 = vpack.c.b16 %v1995, %v1993
    %v2282 = vpack.c.b16 %v1998, %v1996
    %v2283 = vpack.c.b16 %v1999, %v1997
    %v2284 = vpack.c.b16 %v2002, %v2000
    %v2285 = vpack.c.b16 %v2003, %v2001
    %v2286 = vpack.c.b16 %v2006, %v2004
    %v2287 = vpack.c.b16 %v2007, %v2005
    %v2288 = vpack.c.b16 %v2010, %v2008
    %v2289 = vpack.c.b16 %v2011, %v2009
    %v2290 = vpack.c.b16 %v2014, %v2012
    %v2291 = vpack.c.b16 %v2015, %v2013
    %v2292 = vpack.c.b16 %v2018, %v2016
    %v2293 = vpack.c.b16 %v2019, %v2017
    %v2294 = vpack.c.b16 %v2022, %v2020
    %v2295 = vpack.c.b16 %v2023, %v2021
    %v2296 = vpack.c.b16 %v2026, %v2024
    %v2297 = vpack.c.b16 %v2027, %v2025
    %v2298 = vpack.c.b16 %v2030, %v2028
    %v2299 = vpack.c.b16 %v2031, %v2029
    %v2300 = vpack.c.b16 %v2034, %v2032
    %v2301 = vpack.c.b16 %v2035, %v2033
    %v2302 = vpack.c.b16 %v2038, %v2036
    %v2303 = vpack.c.b16 %v2039, %v2037
    %v2304 = vpack.c.b16 %v2042, %v2040
    %v2305 = vpack.c.b16 %v2043, %v2041
    %v2306 = vpack.c.b16 %v2046, %v2044
    %v2307 = vpack.c.b16 %v2047, %v2045
    %v2308 = vpack.c.b16 %v2050, %v2048
    %v2309 = vpack.c.b16 %v2051, %v2049
    %v2310 = vpack.c.b16 %v2054, %v2052
    %v2311 = vpack.c.b16 %v2055, %v2053
    %v2312 = vpack.c.b16 %v2058, %v2056
    %v2313 = vpack.c.b16 %v2059, %v2057
    %v2314 = vpack.c.b16 %v2062, %v2060
    %v2315 = vpack.c.b16 %v2063, %v2061
    %v2316 = vpack.c.b16 %v2066, %v2064
    %v2317 = vpack.c.b16 %v2067, %v2065
    %v2318 = vpack.c.b16 %v2070, %v2068
    %v2319 = vpack.c.b16 %v2071, %v2069
    %v2320 = vpack.c.b16 %v2074, %v2072
    %v2321 = vpack.c.b16 %v2075, %v2073
    %v2322 = vpack.c.b16 %v2078, %v2076
    %v2323 = vpack.c.b16 %v2079, %v2077
    %v2324 = vpack.c.b16 %v2082, %v2080
    %v2325 = vpack.c.b16 %v2083, %v2081
    %v2326 = vpack.c.b16 %v2086, %v2084
    %v2327 = vpack.c.b16 %v2087, %v2085
    %v2328 = vpack.c.b16 %v2090, %v2088
    %v2329 = vpack.c.b16 %v2091, %v2089
    %v2330 = vpack.c.b16 %v2094, %v2092
    %v2331 = vpack.c.b16 %v2095, %v2093
    %v2332 = vpack.c.b16 %v2098, %v2096
    %v2333 = vpack.c.b16 %v2099, %v2097
    %v2334 = vpack.c.b16 %v2102, %v2100
    %v2335 = vpack.c.b16 %v2103, %v2101
    %v2336 = vpack.c.b16 %v2106, %v2104
    %v2337 = vpack.c.b16 %v2107, %v2105
    %v2338 = vpack.c.b16 %v2110, %v2108
    %v2339 = vpack.c.b16 %v2111, %v2109
    %v2340 = vpack.c.b16 %v2114, %v2112
    %v2341 = vpack.c.b16 %v2115, %v2113
    %v2342 = vpack.c.b16 %v2118, %v2116
    %v2343 = vpack.c.b16 %v2119, %v2117
    %v2344 = vpack.c.b16 %v2122, %v2120
    %v2345 = vpack.c.b16 %v2123, %v2121
    %v2346 = vpack.c.b16 %v2126, %v2124
    %v2347 = vpack.c.b16 %v2127, %v2125
    %v2348 = vpack.c.b16 %v2130, %v2128
    %v2349 = vpack.c.b16 %v2131, %v2129
    %v2350 = vpack.c.b16 %v2134, %v2132
    %v2351 = vpack.c.b16 %v2135, %v2133
    %v2352 = vpack.c.b16 %v2138, %v2136
    %v2353 = vpack.c.b16 %v2139, %v2137
    %v2354 = vpack.c.b16 %v2142, %v2140
    %v2355 = vpack.c.b16 %v2143, %v2141
    %v2356 = vpack.c.b16 %v2146, %v2144
    %v2357 = vpack.c.b16 %v2147, %v2145
    %v2358 = vpack.c.b16 %v2150, %v2148
    %v2359 = vpack.c.b16 %v2151, %v2149
    %v2360 = vpack.c.b16 %v2154, %v2152
    %v2361 = vpack.c.b16 %v2155, %v2153
    %v2362 = vpack.c.b16 %v2158, %v2156
    %v2363 = vpack.c.b16 %v2159, %v2157
    %v2364 = vpack.c.b16 %v2162, %v2160
    %v2365 = vpack.c.b16 %v2163, %v2161
    %v2366 = vpack.c.b16 %v2166, %v2164
    %v2367 = vpack.c.b16 %v2167, %v2165
    %v2368 = vpack.c.b16 %v2170, %v2168
    %v2369 = vpack.c.b16 %v2171, %v2169
    %v2370 = vpack.c.b16 %v2174, %v2172
    %v2371 = vpack.c.b16 %v2175, %v2173
    %v2372 = vpack.c.b16 %v2178, %v2176
    %v2373 = vpack.c.b16 %v2179, %v2177
    %v2374 = vpack.c.b16 %v2182, %v2180
    %v2375 = vpack.c.b16 %v2183, %v2181
    %v2376 = vpack.c.b16 %v2186, %v2184
    %v2377 = vpack.c.b16 %v2187, %v2185
    %v2378 = vpack.c.b16 %v2190, %v2188
    %v2379 = vpack.c.b16 %v2191, %v2189
    %v2380 = vpack.c.b16 %v2194, %v2192
    %v2381 = vpack.c.b16 %v2195, %v2193
    %v2382 = vpack.c.b16 %v2198, %v2196
    %v2383 = vpack.c.b16 %v2199, %v2197
    %v2384 = vpack.c.b16 %v2202, %v2200
    %v2385 = vpack.c.b16 %v2203, %v2201
    %v2386 = vpack.c.b16 %v2206, %v2204
    %v2387 = vpack.c.b16 %v2207, %v2205
    %v2388 = vpack.c.b16 %v2210, %v2208
    %v2389 = vpack.c.b16 %v2211, %v2209
    %v2390 = vpack.c.b16 %v2214, %v2212
    %v2391 = vpack.c.b16 %v2215, %v2213
    %v2392 = vpack.c.b16 %v2218, %v2216
    %v2393 = vpack.c.b16 %v2219, %v2217
    %v2394 = vpack.c.b16 %v2222, %v2220
    %v2395 = vpack.c.b16 %v2223, %v2221
    %v2396 = vpack.c.b16 %v2226, %v2224
    %v2397 = vpack.c.b16 %v2227, %v2225
    %v2398 = vpack.c.b16 %v2230, %v2228
    %v2399 = vpack.c.b16 %v2231, %v2229
    %v2400 = vpack.c.b16 %v2234, %v2232
    %v2401 = vpack.c.b16 %v2235, %v2233
    %v2402 = vpack.c.b16 %v2238, %v2236
    %v2403 = vpack.c.b16 %v2239, %v2237
    %v2404 = vpack.c.b16 %v2242, %v2240
    %v2405 = vpack.c.b16 %v2243, %v2241
    %v2406 = vpack.c.b16 %v2246, %v2244
    %v2407 = vpack.c.b16 %v2247, %v2245
    %2568 = vmatprep.subr.bf16.mxu0 %v2249
    %2569 = vmatpush1.bf16.msra.mxu0 %v2248
    %2570 = vmatprep.subr.bf16.mxu0 %v2251
    %2571 = vmatpush1.bf16.msra.mxu0 %v2250
    %2572 = vmatprep.subr.bf16.mxu0 %v2253
    %2573 = vmatpush1.bf16.msra.mxu0 %v2252
    %2574 = vmatprep.subr.bf16.mxu0 %v2255
    %2575 = vmatpush1.bf16.msra.mxu0 %v2254
    %2576 = vmatprep.subr.bf16.mxu0 %v2257
    %2577 = vmatpush1.bf16.msra.mxu0 %v2256
    %2578 = vmatprep.subr.bf16.mxu0 %v2259
    %2579 = vmatpush1.bf16.msra.mxu0 %v2258
    %2580 = vmatprep.subr.bf16.mxu0 %v2261
    %2581 = vmatpush1.bf16.msra.mxu0 %v2260
    %2582 = vmatprep.subr.bf16.mxu0 %v2263
    %2583 = vmatpush1.bf16.msra.mxu0 %v2262
    %2584 = vmatprep.subr.bf16.mxu0 %v2265
    %2585 = vmatpush1.bf16.msra.mxu0 %v2264
    %2586 = vmatprep.subr.bf16.mxu0 %v2267
    %2587 = vmatpush1.bf16.msra.mxu0 %v2266
    %2588 = vmatprep.subr.bf16.mxu0 %v2269
    %2589 = vmatpush1.bf16.msra.mxu0 %v2268
    %2590 = vmatprep.subr.bf16.mxu0 %v2271
    %2591 = vmatpush1.bf16.msra.mxu0 %v2270
    %2592 = vmatprep.subr.bf16.mxu0 %v2273
    %2593 = vmatpush1.bf16.msra.mxu0 %v2272
    %2594 = vmatprep.subr.bf16.mxu0 %v2275
    %2595 = vmatpush1.bf16.msra.mxu0 %v2274
    %2596 = vmatprep.subr.bf16.mxu0 %v2277
    %2597 = vmatpush1.bf16.msra.mxu0 %v2276
    %2598 = vmatprep.subr.bf16.mxu0 %v2279
    %2599 = vmatpush1.bf16.msra.mxu0 %v2278
    %2600 = vmatprep.mubr.bf16.mxu0 %v1587
    %2601 = vmatmul.mubr.bf16.gmra.mrb[0].mxu0 %v1586
    %v2602 = vpop.f32.mrb[0].mxu0
    %v2603 = vadd.f32 %v1761, %v2602
    %v2604 = vpop.f32.mrb[0].mxu0
    %v2605 = vadd.f32 %v1765, %v2604
    %v2606 = vpop.f32.mrb[0].mxu0
    %v2607 = vpop.f32.mrb[0].mxu0
    %2608 = vdwg.mxu0
    %2609 = vmatprep.subr.bf16.mxu0 %v2281
    %2610 = vmatpush1.bf16.msra.mxu0 %v2280
    %2611 = vmatprep.subr.bf16.mxu0 %v2283
    %2612 = vmatpush1.bf16.msra.mxu0 %v2282
    %2613 = vmatprep.subr.bf16.mxu0 %v2285
    %2614 = vmatpush1.bf16.msra.mxu0 %v2284
    %2615 = vmatprep.subr.bf16.mxu0 %v2287
    %2616 = vmatpush1.bf16.msra.mxu0 %v2286
    %2617 = vmatprep.subr.bf16.mxu0 %v2289
    %2618 = vmatpush1.bf16.msra.mxu0 %v2288
    %2619 = vmatprep.subr.bf16.mxu0 %v2291
    %2620 = vmatpush1.bf16.msra.mxu0 %v2290
    %2621 = vmatprep.subr.bf16.mxu0 %v2293
    %2622 = vmatpush1.bf16.msra.mxu0 %v2292
    %2623 = vmatprep.subr.bf16.mxu0 %v2295
    %2624 = vmatpush1.bf16.msra.mxu0 %v2294
    %2625 = vmatprep.subr.bf16.mxu0 %v2297
    %2626 = vmatpush1.bf16.msra.mxu0 %v2296
    %2627 = vmatprep.subr.bf16.mxu0 %v2299
    %2628 = vmatpush1.bf16.msra.mxu0 %v2298
    %2629 = vmatprep.subr.bf16.mxu0 %v2301
    %2630 = vmatpush1.bf16.msra.mxu0 %v2300
    %2631 = vmatprep.subr.bf16.mxu0 %v2303
    %2632 = vmatpush1.bf16.msra.mxu0 %v2302
    %2633 = vmatprep.subr.bf16.mxu0 %v2305
    %2634 = vmatpush1.bf16.msra.mxu0 %v2304
    %2635 = vmatprep.subr.bf16.mxu0 %v2307
    %2636 = vmatpush1.bf16.msra.mxu0 %v2306
    %2637 = vmatprep.subr.bf16.mxu0 %v2309
    %2638 = vmatpush1.bf16.msra.mxu0 %v2308
    %2639 = vmatprep.subr.bf16.mxu0 %v2311
    %2640 = vmatpush1.bf16.msra.mxu0 %v2310
    %2641 = vmatprep.mubr.bf16.mxu0 %v1589
    %2642 = vmatmul.mubr.bf16.gmra.mrb[0].mxu0 %v1588
    %v2643 = vpop.f32.mrb[0].mxu0
    %v2644 = vadd.f32 %v2603, %v2643
    %v2645 = vpop.f32.mrb[0].mxu0
    %v2646 = vadd.f32 %v2605, %v2645
    %v2647 = vpop.f32.mrb[0].mxu0
    %v2648 = vpop.f32.mrb[0].mxu0
    %2649 = vdwg.mxu0
    %2650 = vmatprep.subr.bf16.mxu0 %v2313
    %2651 = vmatpush1.bf16.msra.mxu0 %v2312
    %2652 = vmatprep.subr.bf16.mxu0 %v2315
    %2653 = vmatpush1.bf16.msra.mxu0 %v2314
    %2654 = vmatprep.subr.bf16.mxu0 %v2317
    %2655 = vmatpush1.bf16.msra.mxu0 %v2316
    %2656 = vmatprep.subr.bf16.mxu0 %v2319
    %2657 = vmatpush1.bf16.msra.mxu0 %v2318
    %2658 = vmatprep.subr.bf16.mxu0 %v2321
    %2659 = vmatpush1.bf16.msra.mxu0 %v2320
    %2660 = vmatprep.subr.bf16.mxu0 %v2323
    %2661 = vmatpush1.bf16.msra.mxu0 %v2322
    %2662 = vmatprep.subr.bf16.mxu0 %v2325
    %2663 = vmatpush1.bf16.msra.mxu0 %v2324
    %2664 = vmatprep.subr.bf16.mxu0 %v2327
    %2665 = vmatpush1.bf16.msra.mxu0 %v2326
    %2666 = vmatprep.subr.bf16.mxu0 %v2329
    %2667 = vmatpush1.bf16.msra.mxu0 %v2328
    %2668 = vmatprep.subr.bf16.mxu0 %v2331
    %2669 = vmatpush1.bf16.msra.mxu0 %v2330
    %2670 = vmatprep.subr.bf16.mxu0 %v2333
    %2671 = vmatpush1.bf16.msra.mxu0 %v2332
    %2672 = vmatprep.subr.bf16.mxu0 %v2335
    %2673 = vmatpush1.bf16.msra.mxu0 %v2334
    %2674 = vmatprep.subr.bf16.mxu0 %v2337
    %2675 = vmatpush1.bf16.msra.mxu0 %v2336
    %2676 = vmatprep.subr.bf16.mxu0 %v2339
    %2677 = vmatpush1.bf16.msra.mxu0 %v2338
    %2678 = vmatprep.subr.bf16.mxu0 %v2341
    %2679 = vmatpush1.bf16.msra.mxu0 %v2340
    %2680 = vmatprep.subr.bf16.mxu0 %v2343
    %2681 = vmatpush1.bf16.msra.mxu0 %v2342
    %2682 = vmatprep.mubr.bf16.mxu0 %v1591
    %2683 = vmatmul.mubr.bf16.gmra.mrb[0].mxu0 %v1590
    %v2684 = vpop.f32.mrb[0].mxu0
    %v2685 = vadd.f32 %v2644, %v2684
    %v2686 = vpop.f32.mrb[0].mxu0
    %v2687 = vadd.f32 %v2646, %v2686
    %v2688 = vpop.f32.mrb[0].mxu0
    %v2689 = vpop.f32.mrb[0].mxu0
    %2690 = vdwg.mxu0
    %2691 = vmatprep.subr.bf16.mxu0 %v2345
    %2692 = vmatpush1.bf16.msra.mxu0 %v2344
    %2693 = vmatprep.subr.bf16.mxu0 %v2347
    %2694 = vmatpush1.bf16.msra.mxu0 %v2346
    %2695 = vmatprep.subr.bf16.mxu0 %v2349
    %2696 = vmatpush1.bf16.msra.mxu0 %v2348
    %2697 = vmatprep.subr.bf16.mxu0 %v2351
    %2698 = vmatpush1.bf16.msra.mxu0 %v2350
    %2699 = vmatprep.subr.bf16.mxu0 %v2353
    %2700 = vmatpush1.bf16.msra.mxu0 %v2352
    %2701 = vmatprep.subr.bf16.mxu0 %v2355
    %2702 = vmatpush1.bf16.msra.mxu0 %v2354
    %2703 = vmatprep.subr.bf16.mxu0 %v2357
    %2704 = vmatpush1.bf16.msra.mxu0 %v2356
    %2705 = vmatprep.subr.bf16.mxu0 %v2359
    %2706 = vmatpush1.bf16.msra.mxu0 %v2358
    %2707 = vmatprep.subr.bf16.mxu0 %v2361
    %2708 = vmatpush1.bf16.msra.mxu0 %v2360
    %2709 = vmatprep.subr.bf16.mxu0 %v2363
    %2710 = vmatpush1.bf16.msra.mxu0 %v2362
    %2711 = vmatprep.subr.bf16.mxu0 %v2365
    %2712 = vmatpush1.bf16.msra.mxu0 %v2364
    %2713 = vmatprep.subr.bf16.mxu0 %v2367
    %2714 = vmatpush1.bf16.msra.mxu0 %v2366
    %2715 = vmatprep.subr.bf16.mxu0 %v2369
    %2716 = vmatpush1.bf16.msra.mxu0 %v2368
    %2717 = vmatprep.subr.bf16.mxu0 %v2371
    %2718 = vmatpush1.bf16.msra.mxu0 %v2370
    %2719 = vmatprep.subr.bf16.mxu0 %v2373
    %2720 = vmatpush1.bf16.msra.mxu0 %v2372
    %2721 = vmatprep.subr.bf16.mxu0 %v2375
    %2722 = vmatpush1.bf16.msra.mxu0 %v2374
    %2723 = vmatprep.mubr.bf16.mxu0 %v1593
    %2724 = vmatmul.mubr.bf16.gmra.mrb[0].mxu0 %v1592
    %v2725 = vpop.f32.mrb[0].mxu0
    %v2726 = vadd.f32 %v2685, %v2725
    %v2727 = vpop.f32.mrb[0].mxu0
    %v2728 = vadd.f32 %v2687, %v2727
    %v2729 = vpop.f32.mrb[0].mxu0
    %v2730 = vpop.f32.mrb[0].mxu0
    %2731 = vdwg.mxu0
    %2732 = vmatprep.subr.bf16.mxu0 %v2377
    %2733 = vmatpush1.bf16.msra.mxu0 %v2376
    %2734 = vmatprep.subr.bf16.mxu0 %v2379
    %2735 = vmatpush1.bf16.msra.mxu0 %v2378
    %2736 = vmatprep.subr.bf16.mxu0 %v2381
    %2737 = vmatpush1.bf16.msra.mxu0 %v2380
    %2738 = vmatprep.subr.bf16.mxu0 %v2383
    %2739 = vmatpush1.bf16.msra.mxu0 %v2382
    %2740 = vmatprep.subr.bf16.mxu0 %v2385
    %2741 = vmatpush1.bf16.msra.mxu0 %v2384
    %2742 = vmatprep.subr.bf16.mxu0 %v2387
    %2743 = vmatpush1.bf16.msra.mxu0 %v2386
    %2744 = vmatprep.subr.bf16.mxu0 %v2389
    %2745 = vmatpush1.bf16.msra.mxu0 %v2388
    %2746 = vmatprep.subr.bf16.mxu0 %v2391
    %2747 = vmatpush1.bf16.msra.mxu0 %v2390
    %2748 = vmatprep.subr.bf16.mxu0 %v2393
    %2749 = vmatpush1.bf16.msra.mxu0 %v2392
    %2750 = vmatprep.subr.bf16.mxu0 %v2395
    %2751 = vmatpush1.bf16.msra.mxu0 %v2394
    %2752 = vmatprep.subr.bf16.mxu0 %v2397
    %2753 = vmatpush1.bf16.msra.mxu0 %v2396
    %2754 = vmatprep.subr.bf16.mxu0 %v2399
    %2755 = vmatpush1.bf16.msra.mxu0 %v2398
    %2756 = vmatprep.subr.bf16.mxu0 %v2401
    %2757 = vmatpush1.bf16.msra.mxu0 %v2400
    %2758 = vmatprep.subr.bf16.mxu0 %v2403
    %2759 = vmatpush1.bf16.msra.mxu0 %v2402
    %2760 = vmatprep.subr.bf16.mxu0 %v2405
    %2761 = vmatpush1.bf16.msra.mxu0 %v2404
    %2762 = vmatprep.subr.bf16.mxu0 %v2407
    %2763 = vmatpush1.bf16.msra.mxu0 %v2406
    %2764 = vmatprep.mubr.bf16.mxu0 %v1595
    %2765 = vmatmul.mubr.bf16.gmra.mrb[0].mxu0 %v1594
    %v2766 = vpop.f32.mrb[0].mxu0
    %v2767 = vadd.f32 %v2726, %v2766
    %v2768 = vpop.f32.mrb[0].mxu0
    %v2769 = vadd.f32 %v2728, %v2768
    %v2770 = vpop.f32.mrb[0].mxu0
    %v2771 = vpop.f32.mrb[0].mxu0
    %2772 = vdwg.mxu0
    %2774 = vrot.lane.b32.xlu0 %v2767, 64
    %v2775 = vpop.permute.xlu0 %2774
    %v2777 = vmax.f32 %v2767, %v2775
    %2779 = vrot.lane.b32.xlu0 %v2769, 64
    %v2780 = vpop.permute.xlu0 %2779
    %v2782 = vmax.f32 %v2769, %v2780
    %2784 = vrot.lane.b32.xlu0 %v2782, 64
    %v2785 = vpop.permute.xlu0 %2784
    %v2787 = vsel %vm1213, %v2777, %v2785
    %v2788 = vsel %vm1327, %v2787, -inf
    %v2789 = vrot.slane %v2788, 4
    %v2790 = vmax.f32 %v2788, %v2789
    %v2791 = vrot.slane %v2790, 2
    %v2792 = vmax.f32 %v2790, %v2791
    %v2793 = vrot.slane %v2792, 1
    %v2794 = vmax.f32 %v2792, %v2793
    %vm2795 = vcmask 1043458
    %v2796 = vsel %vm2795, %v2787, -inf
    %v2797 = vrot.slane %v2796, 4
    %v2798 = vmax.f32 %v2796, %v2797
    %v2799 = vrot.slane %v2798, 2
    %v2800 = vmax.f32 %v2798, %v2799
    %v2801 = vrot.slane %v2800, 1
    %v2802 = vmax.f32 %v2800, %v2801
    %vm2803 = vcmask 1045508
    %v2804 = vsel %vm2803, %v2787, -inf
    %v2805 = vrot.slane %v2804, 4
    %v2806 = vmax.f32 %v2804, %v2805
    %v2807 = vrot.slane %v2806, 2
    %v2808 = vmax.f32 %v2806, %v2807
    %v2809 = vrot.slane %v2808, 1
    %v2810 = vmax.f32 %v2808, %v2809
    %v2811 = vsel %vm1275, %v2787, -inf
    %v2812 = vrot.slane %v2811, 4
    %v2813 = vmax.f32 %v2811, %v2812
    %v2814 = vrot.slane %v2813, 2
    %v2815 = vmax.f32 %v2813, %v2814
    %v2816 = vrot.slane %v2815, 1
    %v2817 = vmax.f32 %v2815, %v2816
    %v2820 = vrot.slane %v2810, 7
    %v2821 = vrot.slane %v2817, 7
    %v2824 = vsel %vm1277, %v2794, %v2820
    %v2825 = vsel %vm1277, %v2802, %v2821
    %v2826 = vmax.f32 %v2824, 0.0
    %v2827 = vmax.f32 %v2825, 0.0
    %v2828 = vpack.c.bf16 %v2826, %v2826
    %v2829 = vpack.c.bf16 %v2827, %v2827
    %v2830 = vld [vmem:[%s5] sm:$0xf]
    %v2831 = vld [vmem:[%s5 + $0x4] sm:$0xf]
    %v2832 = vld [vmem:[%s5 + $0x8] sm:$0xf]
    %v2833 = vld [vmem:[%s5 + $0xc] sm:$0xf]
    %v2834 = vld [vmem:[%s5 + $0x10] sm:$0xf]
    %v2835 = vld [vmem:[%s5 + $0x14] sm:$0xf]
    %v2836 = vld [vmem:[%s5 + $0x18] sm:$0xf]
    %v2837 = vld [vmem:[%s5 + $0x1c] sm:$0xf]
    %v2838 = vld [vmem:[%s5 + $0x20] sm:$0xf]
    %v2839 = vld [vmem:[%s5 + $0x24] sm:$0xf]
    %v2840 = vld [vmem:[%s5 + $0x28] sm:$0xf]
    %v2841 = vld [vmem:[%s5 + $0x2c] sm:$0xf]
    %v2842 = vld [vmem:[%s5 + $0x30] sm:$0xf]
    %v2843 = vld [vmem:[%s5 + $0x34] sm:$0xf]
    %v2844 = vld [vmem:[%s5 + $0x38] sm:$0xf]
    %v2845 = vld [vmem:[%s5 + $0x3c] sm:$0xf]
    %v2846 = vld [vmem:[%s5 + $0x40] sm:$0xf]
    %v2847 = vld [vmem:[%s5 + $0x44] sm:$0xf]
    %v2848 = vld [vmem:[%s5 + $0x48] sm:$0xf]
    %v2849 = vld [vmem:[%s5 + $0x4c] sm:$0xf]
    %v2850 = vld [vmem:[%s5 + $0x50] sm:$0xf]
    %v2851 = vld [vmem:[%s5 + $0x54] sm:$0xf]
    %v2852 = vld [vmem:[%s5 + $0x58] sm:$0xf]
    %v2853 = vld [vmem:[%s5 + $0x5c] sm:$0xf]
    %v2854 = vld [vmem:[%s5 + $0x60] sm:$0xf]
    %v2855 = vld [vmem:[%s5 + $0x64] sm:$0xf]
    %v2856 = vld [vmem:[%s5 + $0x68] sm:$0xf]
    %v2857 = vld [vmem:[%s5 + $0x6c] sm:$0xf]
    %v2858 = vld [vmem:[%s5 + $0x70] sm:$0xf]
    %v2859 = vld [vmem:[%s5 + $0x74] sm:$0xf]
    %v2860 = vld [vmem:[%s5 + $0x78] sm:$0xf]
    %v2861 = vld [vmem:[%s5 + $0x7c] sm:$0xf]
    %v2862 = vld [vmem:[%s6] sm:$0x1]
    %v2864 = vlaneseq
    %v2865 = vshrl.u32 %v2864, 7
    %v2866 = vsub.s32 0, %v2865
    %v2867 = vrot.slane %v2862, %v2866
    %v2901 = vunpack.c.l.b16 %v2830
    %v2902 = vunpack.c.l.b16 %v2831
    %v2903 = vunpack.c.l.b16 %v2832
    %v2904 = vunpack.c.l.b16 %v2833
    %v2905 = vunpack.c.l.b16 %v2834
    %v2906 = vunpack.c.l.b16 %v2835
    %v2907 = vunpack.c.l.b16 %v2836
    %v2908 = vunpack.c.l.b16 %v2837
    %v2909 = vunpack.c.l.b16 %v2838
    %v2910 = vunpack.c.l.b16 %v2839
    %v2911 = vunpack.c.l.b16 %v2840
    %v2912 = vunpack.c.l.b16 %v2841
    %v2913 = vunpack.c.l.b16 %v2842
    %v2914 = vunpack.c.l.b16 %v2843
    %v2915 = vunpack.c.l.b16 %v2844
    %v2916 = vunpack.c.l.b16 %v2845
    %v2917 = vunpack.c.l.b16 %v2846
    %v2918 = vunpack.c.l.b16 %v2847
    %v2919 = vunpack.c.l.b16 %v2848
    %v2920 = vunpack.c.l.b16 %v2849
    %v2921 = vunpack.c.l.b16 %v2850
    %v2922 = vunpack.c.l.b16 %v2851
    %v2923 = vunpack.c.l.b16 %v2852
    %v2924 = vunpack.c.l.b16 %v2853
    %v2925 = vunpack.c.l.b16 %v2854
    %v2926 = vunpack.c.l.b16 %v2855
    %v2927 = vunpack.c.l.b16 %v2856
    %v2928 = vunpack.c.l.b16 %v2857
    %v2929 = vunpack.c.l.b16 %v2858
    %v2930 = vunpack.c.l.b16 %v2859
    %v2931 = vunpack.c.l.b16 %v2860
    %v2932 = vunpack.c.l.b16 %v2861
    %v2933 = vpack.c.b16 %v2902, %v2901
    %v2934 = vpack.c.b16 %v2904, %v2903
    %v2935 = vpack.c.b16 %v2906, %v2905
    %v2936 = vpack.c.b16 %v2908, %v2907
    %v2937 = vpack.c.b16 %v2910, %v2909
    %v2938 = vpack.c.b16 %v2912, %v2911
    %v2939 = vpack.c.b16 %v2914, %v2913
    %v2940 = vpack.c.b16 %v2916, %v2915
    %v2941 = vpack.c.b16 %v2918, %v2917
    %v2942 = vpack.c.b16 %v2920, %v2919
    %v2943 = vpack.c.b16 %v2922, %v2921
    %v2944 = vpack.c.b16 %v2924, %v2923
    %v2945 = vpack.c.b16 %v2926, %v2925
    %v2946 = vpack.c.b16 %v2928, %v2927
    %v2947 = vpack.c.b16 %v2930, %v2929
    %v2948 = vpack.c.b16 %v2932, %v2931
    %2965 = vmatprep.subr.bf16.mxu0 0
    %2966 = vmatpush1.bf16.msra.mxu0 %v2933
    %2967 = vmatprep.subr.bf16.mxu0 0
    %2968 = vmatpush1.bf16.msra.mxu0 %v2934
    %2969 = vmatprep.subr.bf16.mxu0 0
    %2970 = vmatpush1.bf16.msra.mxu0 %v2935
    %2971 = vmatprep.subr.bf16.mxu0 0
    %2972 = vmatpush1.bf16.msra.mxu0 %v2936
    %2973 = vmatprep.subr.bf16.mxu0 0
    %2974 = vmatpush1.bf16.msra.mxu0 %v2937
    %2975 = vmatprep.subr.bf16.mxu0 0
    %2976 = vmatpush1.bf16.msra.mxu0 %v2938
    %2977 = vmatprep.subr.bf16.mxu0 0
    %2978 = vmatpush1.bf16.msra.mxu0 %v2939
    %2979 = vmatprep.subr.bf16.mxu0 0
    %2980 = vmatpush1.bf16.msra.mxu0 %v2940
    %2981 = vmatprep.subr.bf16.mxu0 0
    %2982 = vmatpush1.bf16.msra.mxu0 %v2941
    %2983 = vmatprep.subr.bf16.mxu0 0
    %2984 = vmatpush1.bf16.msra.mxu0 %v2942
    %2985 = vmatprep.subr.bf16.mxu0 0
    %2986 = vmatpush1.bf16.msra.mxu0 %v2943
    %2987 = vmatprep.subr.bf16.mxu0 0
    %2988 = vmatpush1.bf16.msra.mxu0 %v2944
    %2989 = vmatprep.subr.bf16.mxu0 0
    %2990 = vmatpush1.bf16.msra.mxu0 %v2945
    %2991 = vmatprep.subr.bf16.mxu0 0
    %2992 = vmatpush1.bf16.msra.mxu0 %v2946
    %2993 = vmatprep.subr.bf16.mxu0 0
    %2994 = vmatpush1.bf16.msra.mxu0 %v2947
    %2995 = vmatprep.subr.bf16.mxu0 0
    %2996 = vmatpush1.bf16.msra.mxu0 %v2948
    %2997 = vmatprep.mubr.bf16.mxu0 %v2829
    %2998 = vmatmul.mubr.bf16.gmra.mrb[0].mxu0 %v2828
    %v2999 = vpop.f32.mrb[0].mxu0
    %v3000 = vadd.f32 %v2867, %v2999
    %v3001 = vpop.f32.mrb[0].mxu0
    %v3002 = vpop.f32.mrb[0].mxu0
    %v3003 = vpop.f32.mrb[0].mxu0
    %3004 = vdwg.mxu0
    %v3005 = vmax.f32 %v3000, 0.0
    %v3006 = vpack.c.bf16 %v3005, %v3005
    %v3007 = vld [vmem:[%s7] sm:$0xf]
    %v3008 = vld [vmem:[%s7 + $0x4] sm:$0xf]
    %v3009 = vld [vmem:[%s7 + $0x8] sm:$0xf]
    %v3010 = vld [vmem:[%s7 + $0xc] sm:$0xf]
    %v3011 = vld [vmem:[%s7 + $0x10] sm:$0xf]
    %v3012 = vld [vmem:[%s7 + $0x14] sm:$0xf]
    %v3013 = vld [vmem:[%s7 + $0x18] sm:$0xf]
    %v3014 = vld [vmem:[%s7 + $0x1c] sm:$0xf]
    %v3015 = vld [vmem:[%s7 + $0x20] sm:$0xf]
    %v3016 = vld [vmem:[%s7 + $0x24] sm:$0xf]
    %v3017 = vld [vmem:[%s7 + $0x28] sm:$0xf]
    %v3018 = vld [vmem:[%s7 + $0x2c] sm:$0xf]
    %v3019 = vld [vmem:[%s7 + $0x30] sm:$0xf]
    %v3020 = vld [vmem:[%s7 + $0x34] sm:$0xf]
    %v3021 = vld [vmem:[%s7 + $0x38] sm:$0xf]
    %v3022 = vld [vmem:[%s7 + $0x3c] sm:$0xf]
    %v3023 = vld [vmem:[%s8] sm:$0x1]
    %v3025 = vlaneseq
    %v3026 = vshrl.u32 %v3025, 7
    %v3027 = vsub.s32 0, %v3026
    %v3028 = vrot.slane %v3023, %v3027
    %v3046 = vunpack.c.l.b16 %v3007
    %v3047 = vunpack.c.l.b16 %v3008
    %v3048 = vunpack.c.l.b16 %v3009
    %v3049 = vunpack.c.l.b16 %v3010
    %v3050 = vunpack.c.l.b16 %v3011
    %v3051 = vunpack.c.l.b16 %v3012
    %v3052 = vunpack.c.l.b16 %v3013
    %v3053 = vunpack.c.l.b16 %v3014
    %v3054 = vunpack.c.l.b16 %v3015
    %v3055 = vunpack.c.l.b16 %v3016
    %v3056 = vunpack.c.l.b16 %v3017
    %v3057 = vunpack.c.l.b16 %v3018
    %v3058 = vunpack.c.l.b16 %v3019
    %v3059 = vunpack.c.l.b16 %v3020
    %v3060 = vunpack.c.l.b16 %v3021
    %v3061 = vunpack.c.l.b16 %v3022
    %v3062 = vpack.c.b16 %v3047, %v3046
    %v3063 = vpack.c.b16 %v3049, %v3048
    %v3064 = vpack.c.b16 %v3051, %v3050
    %v3065 = vpack.c.b16 %v3053, %v3052
    %v3066 = vpack.c.b16 %v3055, %v3054
    %v3067 = vpack.c.b16 %v3057, %v3056
    %v3068 = vpack.c.b16 %v3059, %v3058
    %v3069 = vpack.c.b16 %v3061, %v3060
    %3078 = vmatprep.subr.bf16.mxu0 0
    %3079 = vmatpush1.bf16.msra.mxu0 %v3062
    %3080 = vmatprep.subr.bf16.mxu0 0
    %3081 = vmatpush1.bf16.msra.mxu0 %v3063
    %3082 = vmatprep.subr.bf16.mxu0 0
    %3083 = vmatpush1.bf16.msra.mxu0 %v3064
    %3084 = vmatprep.subr.bf16.mxu0 0
    %3085 = vmatpush1.bf16.msra.mxu0 %v3065
    %3086 = vmatprep.subr.bf16.mxu0 0
    %3087 = vmatpush1.bf16.msra.mxu0 %v3066
    %3088 = vmatprep.subr.bf16.mxu0 0
    %3089 = vmatpush1.bf16.msra.mxu0 %v3067
    %3090 = vmatprep.subr.bf16.mxu0 0
    %3091 = vmatpush1.bf16.msra.mxu0 %v3068
    %3092 = vmatprep.subr.bf16.mxu0 0
    %3093 = vmatpush1.bf16.msra.mxu0 %v3069
    %3094 = vmatprep.subr.bf16.mxu0 0
    %3095 = vmatpush1.bf16.msra.mxu0 0
    %3096 = vmatprep.subr.bf16.mxu0 0
    %3097 = vmatpush1.bf16.msra.mxu0 0
    %3098 = vmatprep.subr.bf16.mxu0 0
    %3099 = vmatpush1.bf16.msra.mxu0 0
    %3100 = vmatprep.subr.bf16.mxu0 0
    %3101 = vmatpush1.bf16.msra.mxu0 0
    %3102 = vmatprep.subr.bf16.mxu0 0
    %3103 = vmatpush1.bf16.msra.mxu0 0
    %3104 = vmatprep.subr.bf16.mxu0 0
    %3105 = vmatpush1.bf16.msra.mxu0 0
    %3106 = vmatprep.subr.bf16.mxu0 0
    %3107 = vmatpush1.bf16.msra.mxu0 0
    %3108 = vmatprep.subr.bf16.mxu0 0
    %3109 = vmatpush1.bf16.msra.mxu0 0
    %3110 = vmatprep.mubr.bf16.mxu0 0
    %3111 = vmatmul.mubr.bf16.gmra.mrb[0].mxu0 %v3006
    %v3112 = vpop.f32.mrb[0].mxu0
    %v3113 = vadd.f32 %v3028, %v3112
    %v3114 = vpop.f32.mrb[0].mxu0
    %v3115 = vpop.f32.mrb[0].mxu0
    %v3116 = vpop.f32.mrb[0].mxu0
    %3117 = vdwg.mxu0
    %vm3118 = vcmask 74752
    %3119 = vst.msk [vmem:[#allocation2] sm:$0x3] %vm3118, %v3113
    // Predicated region
    $region38: #{net_forward.1} parent=1 // pred_check
      _
    $region39: #{net_forward.1} parent=1 // pred_check_branch
      %3121 = sbr.rel (0) target = $region41
    $region40: #{net_forward.1} parent=1 // pred_region
      %s3123 = ssub.s32 32, 32
      %3124 = vsyncadd [#allocation3], %s3123
      %s3126 = sshll.u32 [#allocation2], 4
      %s3127 = int_to_ptr.vmem [resolvable:$true] %s3126
      %3129 = dma.vmem_to_hbm [thread:$0]  %s3127, 32, %s9, [#allocation3]
    $region41: #{net_forward.1} parent=1 // pred_fallthru
      _
    // Predicated region
    $region42: #{net_forward.1} parent=1 // pred_check
      _
    $region43: #{net_forward.1} parent=1 // pred_check_branch
      %3131 = sbr.rel (0) target = $region45
    $region44: #{net_forward.1} parent=1 // pred_region
      %3132 = dma.done [#allocation3], 32
    $region45: #{net_forward.1} parent=1 // pred_fallthru
      _
    %3133 = vsyncpa [#allocation3], 1

</llo_original>
